<compile_context>
chip_gen: v5e
topology: v5e:2x2
jax: 0.10.0
libtpu: 0.0.40
codegen_flags: <defaults>
</compile_context>

<pallas_src>
import functools
import math

import jax
import jax.numpy as jnp
from jax.experimental import pallas as pl
from jax.experimental.pallas import tpu as pltpu


def _perceiver_kernel(h_ref, query_ref, ln_w_ref, ln_b_ref,
                      wq_ref, bq_ref, wkv_ref, bkv_ref, wo_ref, bo_ref,
                      out_ref, *, num_heads):
    """Fused Perceiver forward for ONE batch element (grid axis = batch)."""
    C = query_ref.shape[-1]
    H = num_heads
    D = C // H
    scale = D ** -0.5          # F.scaled_dot_product_attention default scale

    ln_w = ln_w_ref[...]       # (1, C)  f32
    ln_b = ln_b_ref[...]       # (1, C)  f32
    wq = wq_ref[...]           # (C, C)  bf16
    bq = bq_ref[...]           # (1, C)  f32
    wkv = wkv_ref[...]         # (C, 2C) bf16  packed [Wk | Wv]
    bkv = bkv_ref[...]         # (1, 2C) f32   packed [bk | bv]
    wo = wo_ref[...]           # (C, C)  bf16
    bo = bo_ref[...]           # (1, C)  f32

    def layernorm(x):          # f32 statistics
        mu = jnp.mean(x, axis=-1, keepdims=True)
        xc = x - mu
        var = jnp.mean(xc * xc, axis=-1, keepdims=True)
        return xc * jax.lax.rsqrt(var + 1e-5) * ln_w + ln_b

    def attention_block(x1, x2):
        """AttentionBlock2.forward(x1, x2): x1 (L1,C) query side, x2 (L2,C) context."""
        x1n = layernorm(x1).astype(jnp.bfloat16)
        x2n = x1n if x2 is x1 else layernorm(x2).astype(jnp.bfloat16)

        # Projections: bf16 operands, f32 accumulation.  Scale folded into q.
        q = (jnp.dot(x1n, wq, preferred_element_type=jnp.float32) + bq) * scale
        kv = jnp.dot(x2n, wkv, preferred_element_type=jnp.float32) + bkv
        q_b = q.astype(jnp.bfloat16)                  # (L1, C)
        k_b = kv[:, :C].astype(jnp.bfloat16)          # (L2, C)
        v_b = kv[:, C:].astype(jnp.bfloat16)          # (L2, C)

        # Per-head attention with lane-aligned head slices; head combine folded
        # into per-head slices of the output projection.
        h_out = jnp.zeros(x1.shape, jnp.float32)
        for hh in range(H):                            # H is small & static
            sl = slice(hh * D, (hh + 1) * D)
            s = jax.lax.dot_general(                   # (L1, L2) = qh @ kh^T
                q_b[:, sl], k_b[:, sl], (((1,), (1,)), ((), ())),
                preferred_element_type=jnp.float32)
            m = jnp.max(s, axis=-1, keepdims=True)
            e = jnp.exp(s - m)
            denom = jnp.sum(e, axis=-1, keepdims=True)
            p = (e * pl.reciprocal(denom, approx=True)).astype(jnp.bfloat16)
            oh = jnp.dot(p, v_b[:, sl],                # (L1, D)
                         preferred_element_type=jnp.float32)
            h_out = h_out + jnp.dot(oh.astype(jnp.bfloat16), wo[sl, :],
                                    preferred_element_type=jnp.float32)
        return x1 + h_out + bo                         # residual (proj bias once)

    query = query_ref[...].astype(jnp.float32)         # (Nq, C) learned query
    h_ctx = h_ref[...].astype(jnp.float32)             # (T,  C) this batch's context

    pre_att = attention_block(query, h_ctx)            # cross-attention
    out = attention_block(pre_att, pre_att)            # self-attention, same weights
    out_ref[...] = out.astype(out_ref.dtype)


def _cost_estimate(B, T, Nq, C, H):
    macs = 0
    macs += Nq * C * C          # q  (block 1)
    macs += T * C * 2 * C       # packed kv (block 1)
    macs += 2 * Nq * T * C      # scores + PV (block 1, summed over heads)
    macs += Nq * C * C          # out proj (block 1)
    macs += Nq * C * C          # q  (block 2)
    macs += Nq * C * 2 * C      # packed kv (block 2)
    macs += 2 * Nq * Nq * C     # scores + PV (block 2)
    macs += Nq * C * C          # out proj (block 2)
    flops = 2 * B * macs
    transcendentals = B * H * Nq * (T + Nq)
    bytes_accessed = (4 * (B * T * C + Nq * C + B * Nq * C)   # h, query, out (f32)
                      + 2 * 4 * C * C                          # bf16 weights
                      + 4 * 6 * C)                             # f32 biases / LN
    return pl.CostEstimate(flops=flops, transcendentals=transcendentals,
                           bytes_accessed=bytes_accessed)


def perceiver_forward(h, params, num_heads):
    """Perceiver.forward(h) — single fused Pallas kernel, grid over batch."""
    B, T, C = h.shape
    Nq = params['query'].shape[1]
    if C % num_heads != 0:
        raise ValueError(f"channels {C} not divisible by num_heads {num_heads}")
    if params['query'].shape[-1] != C:
        raise ValueError("query_size must equal embedding_dim (shared attn weights)")

    h2 = h.reshape(B * T, C)                 # per-batch row blocks for the grid
    query = params['query'].reshape(Nq, C)   # learned query (batch-invariant)

    bf = jnp.bfloat16
    wq = params['wq'].astype(bf)
    wkv = jnp.concatenate([params['wk'], params['wv']], axis=1).astype(bf)  # (C,2C)
    bkv = jnp.concatenate([params['bk'], params['bv']], axis=1)             # (1,2C)
    wo = params['wo'].astype(bf)

    def full_spec(shape):
        return pl.BlockSpec(shape, lambda b: (0,) * len(shape))

    grid_spec = pltpu.PrefetchScalarGridSpec(
        num_scalar_prefetch=0,
        grid=(B,),
        in_specs=[
            pl.BlockSpec((T, C), lambda b: (b, 0)),   # context tile for batch b
            full_spec((Nq, C)),                       # learned query
            full_spec((1, C)), full_spec((1, C)),     # LN weight / bias
            full_spec((C, C)), full_spec((1, C)),     # Wq / bq
            full_spec((C, 2 * C)), full_spec((1, 2 * C)),  # packed Wkv / bkv
            full_spec((C, C)), full_spec((1, C)),     # Wo / bo
        ],
        out_specs=pl.BlockSpec((Nq, C), lambda b: (b, 0)),
    )

    kernel = functools.partial(_perceiver_kernel, num_heads=num_heads)
    out = pl.pallas_call(
        kernel,
        out_shape=jax.ShapeDtypeStruct((B * Nq, C), h.dtype),
        grid_spec=grid_spec,
        compiler_params=pltpu.CompilerParams(
            dimension_semantics=("parallel",),        # megacore sharding on v7x
            vmem_limit_bytes=32 * 1024 * 1024),       # raise v5e's 16 MiB default
        cost_estimate=_cost_estimate(B, T, Nq, C, num_heads),
    )(h2, query, params['ln_w'], params['ln_b'],
      wq, params['bq'], wkv, bkv, wo, params['bo'])
    return out.reshape(B, Nq, C)


# ---------------- pure-JAX reference (mirrors the kernel's mixed precision:
# bf16 matmul operands, f32 accumulation, f32 LN / softmax statistics) --------
def _attn_block_ref(x1, x2, params, num_heads):
    C = x1.shape[-1]
    D = C // num_heads
    f32, bf = jnp.float32, jnp.bfloat16
    ln_w, ln_b = params['ln_w'][0], params['ln_b'][0]

    def ln(x):
        mu = jnp.mean(x, -1, keepdims=True)
        var = jnp.mean((x - mu) ** 2, -1, keepdims=True)
        return (x - mu) / jnp.sqrt(var + 1e-5) * ln_w + ln_b

    x1n, x2n = ln(x1).astype(bf), ln(x2).astype(bf)
    wq, wk = params['wq'].astype(bf), params['wk'].astype(bf)
    wv, wo = params['wv'].astype(bf), params['wo'].astype(bf)

    q = (jnp.einsum('blc,cd->bld', x1n, wq, preferred_element_type=f32)
         + params['bq'][0]) * (D ** -0.5)
    k = jnp.einsum('blc,cd->bld', x2n, wk, preferred_element_type=f32) + params['bk'][0]
    v = jnp.einsum('blc,cd->bld', x2n, wv, preferred_element_type=f32) + params['bv'][0]

    B, L1, _ = q.shape
    L2 = k.shape[1]
    qh = q.reshape(B, L1, num_heads, D).transpose(0, 2, 1, 3).astype(bf)
    kh = k.reshape(B, L2, num_heads, D).transpose(0, 2, 1, 3).astype(bf)
    vh = v.reshape(B, L2, num_heads, D).transpose(0, 2, 1, 3).astype(bf)
    s = jnp.einsum('bhld,bhmd->bhlm', qh, kh, preferred_element_type=f32)
    p = jax.nn.softmax(s, axis=-1).astype(bf)
    o = jnp.einsum('bhlm,bhmd->bhld', p, vh, preferred_element_type=f32)
    o = o.transpose(0, 2, 1, 3).reshape(B, L1, C).astype(bf)
    h_out = jnp.einsum('blc,cd->bld', o, wo, preferred_element_type=f32) + params['bo'][0]
    return x1 + h_out


def perceiver_reference(h, params, num_heads):
    B = h.shape[0]
    query = jnp.broadcast_to(params['query'],
                             (B,) + params['query'].shape[1:]).astype(jnp.float32)
    pre_att = _attn_block_ref(query, h, params, num_heads)
    return _attn_block_ref(pre_att, pre_att, params, num_heads)


if __name__ == "__main__":
    # Small but TPU-layout-friendly shapes consistent with the module
    # (embedding_dim == query_size == C; C multiple of 128, head_dim = 128).
    B, T, C, H = 2, 32, 256, 2
    N_QUERY = 16

    key = jax.random.PRNGKey(0)
    keys = jax.random.split(key, 12)
    qvar = math.sqrt(3.0) * math.sqrt(2.0 / (N_QUERY + N_QUERY))

    params = {
        'query': jax.random.uniform(keys[0], (1, N_QUERY, C), jnp.float32,
                                    minval=-qvar, maxval=qvar),
        'ln_w': jnp.ones((1, C), jnp.float32),
        'ln_b': jnp.zeros((1, C), jnp.float32),
        'wq': 0.05 * jax.random.normal(keys[1], (C, C), jnp.float32),
        'bq': 0.05 * jax.random.normal(keys[2], (1, C), jnp.float32),
        'wk': 0.05 * jax.random.normal(keys[3], (C, C), jnp.float32),
        'bk': 0.05 * jax.random.normal(keys[4], (1, C), jnp.float32),
        'wv': 0.05 * jax.random.normal(keys[5], (C, C), jnp.float32),
        'bv': 0.05 * jax.random.normal(keys[6], (1, C), jnp.float32),
        'wo': 0.05 * jax.random.normal(keys[7], (C, C), jnp.float32),
        'bo': 0.05 * jax.random.normal(keys[8], (1, C), jnp.float32),
    }

    h = jax.random.normal(keys[9], (B, T, C), jnp.float32)

    out = perceiver_forward(h, params, H)
    out = jax.block_until_ready(out)

    ref = perceiver_reference(h, params, H)
    assert out.shape == (B, N_QUERY, C), out.shape
    # bf16 matmul operands + approx-reciprocal softmax => loose-ish tolerance
    assert jnp.allclose(out, ref, atol=1e-2, rtol=1e-2), \
        float(jnp.max(jnp.abs(out - ref)))

    print("KERNEL_OK")
</pallas_src>

<mosaic_0001>
module attributes {stable_mosaic.version = 11 : i64} {
  func.func @_perceiver_kernel(%arg0: i32, %arg1: memref<32x256xf32, #tpu.memory_space<vmem>>, %arg2: memref<16x256xf32, #tpu.memory_space<vmem>>, %arg3: memref<1x256xf32, #tpu.memory_space<vmem>>, %arg4: memref<1x256xf32, #tpu.memory_space<vmem>>, %arg5: memref<256x256xbf16, #tpu.memory_space<vmem>>, %arg6: memref<1x256xf32, #tpu.memory_space<vmem>>, %arg7: memref<256x512xbf16, #tpu.memory_space<vmem>>, %arg8: memref<1x512xf32, #tpu.memory_space<vmem>>, %arg9: memref<256x256xbf16, #tpu.memory_space<vmem>>, %arg10: memref<1x256xf32, #tpu.memory_space<vmem>>, %arg11: memref<16x256xf32, #tpu.memory_space<vmem>>) attributes {dimension_semantics = [#tpu.dimension_semantics<parallel>], iteration_bounds = array<i64: 2>, scalar_prefetch = 0 : i64, scratch_operands = 0 : i64, tpu.core_type = #tpu.core_type<tc>, window_params = [{transform_indices = @transform_0, window_bounds = array<i64: 32, 256>}, {pipeline_mode = #tpu.pipeline_mode<synchronous>, transform_indices = @transform_1, window_bounds = array<i64: 16, 256>}, {pipeline_mode = #tpu.pipeline_mode<synchronous>, transform_indices = @transform_2, window_bounds = array<i64: 1, 256>}, {pipeline_mode = #tpu.pipeline_mode<synchronous>, transform_indices = @transform_3, window_bounds = array<i64: 1, 256>}, {pipeline_mode = #tpu.pipeline_mode<synchronous>, transform_indices = @transform_4, window_bounds = array<i64: 256, 256>}, {pipeline_mode = #tpu.pipeline_mode<synchronous>, transform_indices = @transform_5, window_bounds = array<i64: 1, 256>}, {pipeline_mode = #tpu.pipeline_mode<synchronous>, transform_indices = @transform_6, window_bounds = array<i64: 256, 512>}, {pipeline_mode = #tpu.pipeline_mode<synchronous>, transform_indices = @transform_7, window_bounds = array<i64: 1, 512>}, {pipeline_mode = #tpu.pipeline_mode<synchronous>, transform_indices = @transform_8, window_bounds = array<i64: 256, 256>}, {pipeline_mode = #tpu.pipeline_mode<synchronous>, transform_indices = @transform_9, window_bounds = array<i64: 1, 256>}, {transform_indices = @transform_10, window_bounds = array<i64: 16, 256>}]} {
    %c0 = arith.constant 0 : index
    %c0_0 = arith.constant 0 : index
    %0 = vector.load %arg3[%c0, %c0_0] : memref<1x256xf32, #tpu.memory_space<vmem>>, vector<1x256xf32>
    %c0_1 = arith.constant 0 : index
    %c0_2 = arith.constant 0 : index
    %1 = vector.load %arg4[%c0_1, %c0_2] : memref<1x256xf32, #tpu.memory_space<vmem>>, vector<1x256xf32>
    %c0_3 = arith.constant 0 : index
    %c0_4 = arith.constant 0 : index
    %2 = vector.load %arg5[%c0_3, %c0_4] : memref<256x256xbf16, #tpu.memory_space<vmem>>, vector<256x256xbf16>
    %c0_5 = arith.constant 0 : index
    %c0_6 = arith.constant 0 : index
    %3 = vector.load %arg6[%c0_5, %c0_6] : memref<1x256xf32, #tpu.memory_space<vmem>>, vector<1x256xf32>
    %c0_7 = arith.constant 0 : index
    %c0_8 = arith.constant 0 : index
    %4 = vector.load %arg7[%c0_7, %c0_8] : memref<256x512xbf16, #tpu.memory_space<vmem>>, vector<256x512xbf16>
    %c0_9 = arith.constant 0 : index
    %c0_10 = arith.constant 0 : index
    %5 = vector.load %arg8[%c0_9, %c0_10] : memref<1x512xf32, #tpu.memory_space<vmem>>, vector<1x512xf32>
    %c0_11 = arith.constant 0 : index
    %c0_12 = arith.constant 0 : index
    %6 = vector.load %arg9[%c0_11, %c0_12] : memref<256x256xbf16, #tpu.memory_space<vmem>>, vector<256x256xbf16>
    %c0_13 = arith.constant 0 : index
    %c0_14 = arith.constant 0 : index
    %7 = vector.load %arg10[%c0_13, %c0_14] : memref<1x256xf32, #tpu.memory_space<vmem>>, vector<1x256xf32>
    %c0_15 = arith.constant 0 : index
    %c0_16 = arith.constant 0 : index
    %8 = vector.load %arg2[%c0_15, %c0_16] : memref<16x256xf32, #tpu.memory_space<vmem>>, vector<16x256xf32>
    %c0_17 = arith.constant 0 : index
    %c0_18 = arith.constant 0 : index
    %9 = vector.load %arg1[%c0_17, %c0_18] : memref<32x256xf32, #tpu.memory_space<vmem>>, vector<32x256xf32>
    %cst = arith.constant dense<0.000000e+00> : vector<16xf32>
    %10 = vector.multi_reduction <add>, %8, %cst [1] : vector<16x256xf32> to vector<16xf32>
    %11 = vector.shape_cast %10 : vector<16xf32> to vector<16x1xf32>
    %cst_19 = arith.constant 2.560000e+02 : f32
    %12 = vector.broadcast %cst_19 : f32 to vector<16x1xf32>
    %13 = arith.divf %11, %12 : vector<16x1xf32>
    %14 = vector.broadcast %13 : vector<16x1xf32> to vector<16x256xf32>
    %15 = arith.subf %8, %14 : vector<16x256xf32>
    %16 = arith.mulf %15, %15 : vector<16x256xf32>
    %cst_20 = arith.constant dense<0.000000e+00> : vector<16xf32>
    %17 = vector.multi_reduction <add>, %16, %cst_20 [1] : vector<16x256xf32> to vector<16xf32>
    %18 = vector.shape_cast %17 : vector<16xf32> to vector<16x1xf32>
    %cst_21 = arith.constant 2.560000e+02 : f32
    %19 = vector.broadcast %cst_21 : f32 to vector<16x1xf32>
    %20 = arith.divf %18, %19 : vector<16x1xf32>
    %cst_22 = arith.constant 9.99999974E-6 : f32
    %21 = vector.broadcast %cst_22 : f32 to vector<16x1xf32>
    %22 = arith.addf %20, %21 : vector<16x1xf32>
    %23 = math.rsqrt %22 : vector<16x1xf32>
    %24 = vector.broadcast %23 : vector<16x1xf32> to vector<16x256xf32>
    %25 = arith.mulf %15, %24 : vector<16x256xf32>
    %26 = vector.broadcast %0 : vector<1x256xf32> to vector<16x256xf32>
    %27 = arith.mulf %25, %26 : vector<16x256xf32>
    %28 = vector.broadcast %1 : vector<1x256xf32> to vector<16x256xf32>
    %29 = arith.addf %27, %28 : vector<16x256xf32>
    %30 = arith.truncf %29 : vector<16x256xf32> to vector<16x256xbf16>
    %cst_23 = arith.constant dense<0.000000e+00> : vector<32xf32>
    %31 = vector.multi_reduction <add>, %9, %cst_23 [1] : vector<32x256xf32> to vector<32xf32>
    %32 = vector.shape_cast %31 : vector<32xf32> to vector<32x1xf32>
    %cst_24 = arith.constant 2.560000e+02 : f32
    %33 = vector.broadcast %cst_24 : f32 to vector<32x1xf32>
    %34 = arith.divf %32, %33 : vector<32x1xf32>
    %35 = vector.broadcast %34 : vector<32x1xf32> to vector<32x256xf32>
    %36 = arith.subf %9, %35 : vector<32x256xf32>
    %37 = arith.mulf %36, %36 : vector<32x256xf32>
    %cst_25 = arith.constant dense<0.000000e+00> : vector<32xf32>
    %38 = vector.multi_reduction <add>, %37, %cst_25 [1] : vector<32x256xf32> to vector<32xf32>
    %39 = vector.shape_cast %38 : vector<32xf32> to vector<32x1xf32>
    %cst_26 = arith.constant 2.560000e+02 : f32
    %40 = vector.broadcast %cst_26 : f32 to vector<32x1xf32>
    %41 = arith.divf %39, %40 : vector<32x1xf32>
    %cst_27 = arith.constant 9.99999974E-6 : f32
    %42 = vector.broadcast %cst_27 : f32 to vector<32x1xf32>
    %43 = arith.addf %41, %42 : vector<32x1xf32>
    %44 = math.rsqrt %43 : vector<32x1xf32>
    %45 = vector.broadcast %44 : vector<32x1xf32> to vector<32x256xf32>
    %46 = arith.mulf %36, %45 : vector<32x256xf32>
    %47 = vector.broadcast %0 : vector<1x256xf32> to vector<32x256xf32>
    %48 = arith.mulf %46, %47 : vector<32x256xf32>
    %49 = vector.broadcast %1 : vector<1x256xf32> to vector<32x256xf32>
    %50 = arith.addf %48, %49 : vector<32x256xf32>
    %51 = arith.truncf %50 : vector<32x256xf32> to vector<32x256xbf16>
    %cst_28 = arith.constant dense<0.000000e+00> : vector<16x256xf32>
    %52 = tpu.matmul %30, %2, %cst_28 {dimension_numbers = #tpu.dot_dimension_numbers<[1], [0], [0], [1], [0, 0, 1, 1], [], []>} : vector<16x256xbf16>, vector<256x256xbf16>, vector<16x256xf32> -> vector<16x256xf32>
    %53 = vector.broadcast %3 : vector<1x256xf32> to vector<16x256xf32>
    %54 = arith.addf %52, %53 : vector<16x256xf32>
    %cst_29 = arith.constant 0.0883883461 : f32
    %55 = vector.broadcast %cst_29 : f32 to vector<16x256xf32>
    %56 = arith.mulf %54, %55 : vector<16x256xf32>
    %cst_30 = arith.constant dense<0.000000e+00> : vector<32x512xf32>
    %57 = tpu.matmul %51, %4, %cst_30 {dimension_numbers = #tpu.dot_dimension_numbers<[1], [0], [0], [1], [0, 0, 1, 1], [], []>} : vector<32x256xbf16>, vector<256x512xbf16>, vector<32x512xf32> -> vector<32x512xf32>
    %58 = vector.broadcast %5 : vector<1x512xf32> to vector<32x512xf32>
    %59 = arith.addf %57, %58 : vector<32x512xf32>
    %60 = arith.truncf %56 : vector<16x256xf32> to vector<16x256xbf16>
    %61 = vector.extract_strided_slice %59 {offsets = [0, 0], sizes = [32, 256], strides = [1, 1]} : vector<32x512xf32> to vector<32x256xf32>
    %62 = arith.truncf %61 : vector<32x256xf32> to vector<32x256xbf16>
    %63 = vector.extract_strided_slice %59 {offsets = [0, 256], sizes = [32, 256], strides = [1, 1]} : vector<32x512xf32> to vector<32x256xf32>
    %64 = arith.truncf %63 : vector<32x256xf32> to vector<32x256xbf16>
    %cst_31 = arith.constant 0.000000e+00 : f32
    %65 = vector.broadcast %cst_31 : f32 to vector<16x256xf32>
    %66 = vector.extract_strided_slice %60 {offsets = [0, 0], sizes = [16, 128], strides = [1, 1]} : vector<16x256xbf16> to vector<16x128xbf16>
    %67 = vector.extract_strided_slice %62 {offsets = [0, 0], sizes = [32, 128], strides = [1, 1]} : vector<32x256xbf16> to vector<32x128xbf16>
    %cst_32 = arith.constant dense<0.000000e+00> : vector<16x32xf32>
    %68 = tpu.matmul %66, %67, %cst_32 {dimension_numbers = #tpu.dot_dimension_numbers<[1], [1], [0], [0], [0, 0, 1, 0], [], []>} : vector<16x128xbf16>, vector<32x128xbf16>, vector<16x32xf32> -> vector<16x32xf32>
    %cst_33 = arith.constant dense<0xFF800000> : vector<16xf32>
    %69 = vector.multi_reduction <maximumf>, %68, %cst_33 [1] : vector<16x32xf32> to vector<16xf32>
    %70 = vector.shape_cast %69 : vector<16xf32> to vector<16x1xf32>
    %71 = vector.broadcast %70 : vector<16x1xf32> to vector<16x32xf32>
    %72 = arith.subf %68, %71 : vector<16x32xf32>
    %73 = math.exp %72 : vector<16x32xf32>
    %cst_34 = arith.constant dense<0.000000e+00> : vector<16xf32>
    %74 = vector.multi_reduction <add>, %73, %cst_34 [1] : vector<16x32xf32> to vector<16xf32>
    %75 = vector.shape_cast %74 : vector<16xf32> to vector<16x1xf32>
    %76 = tpu.reciprocal %75 {approx = true} : vector<16x1xf32> -> vector<16x1xf32>
    %77 = vector.broadcast %76 : vector<16x1xf32> to vector<16x32xf32>
    %78 = arith.mulf %73, %77 : vector<16x32xf32>
    %79 = arith.truncf %78 : vector<16x32xf32> to vector<16x32xbf16>
    %80 = vector.extract_strided_slice %64 {offsets = [0, 0], sizes = [32, 128], strides = [1, 1]} : vector<32x256xbf16> to vector<32x128xbf16>
    %cst_35 = arith.constant dense<0.000000e+00> : vector<16x128xf32>
    %81 = tpu.matmul %79, %80, %cst_35 {dimension_numbers = #tpu.dot_dimension_numbers<[1], [0], [0], [1], [0, 0, 1, 1], [], []>} : vector<16x32xbf16>, vector<32x128xbf16>, vector<16x128xf32> -> vector<16x128xf32>
    %82 = arith.truncf %81 : vector<16x128xf32> to vector<16x128xbf16>
    %83 = vector.extract_strided_slice %6 {offsets = [0, 0], sizes = [128, 256], strides = [1, 1]} : vector<256x256xbf16> to vector<128x256xbf16>
    %cst_36 = arith.constant dense<0.000000e+00> : vector<16x256xf32>
    %84 = tpu.matmul %82, %83, %cst_36 {dimension_numbers = #tpu.dot_dimension_numbers<[1], [0], [0], [1], [0, 0, 1, 1], [], []>} : vector<16x128xbf16>, vector<128x256xbf16>, vector<16x256xf32> -> vector<16x256xf32>
    %85 = arith.addf %65, %84 : vector<16x256xf32>
    %86 = vector.extract_strided_slice %60 {offsets = [0, 128], sizes = [16, 128], strides = [1, 1]} : vector<16x256xbf16> to vector<16x128xbf16>
    %87 = vector.extract_strided_slice %62 {offsets = [0, 128], sizes = [32, 128], strides = [1, 1]} : vector<32x256xbf16> to vector<32x128xbf16>
    %cst_37 = arith.constant dense<0.000000e+00> : vector<16x32xf32>
    %88 = tpu.matmul %86, %87, %cst_37 {dimension_numbers = #tpu.dot_dimension_numbers<[1], [1], [0], [0], [0, 0, 1, 0], [], []>} : vector<16x128xbf16>, vector<32x128xbf16>, vector<16x32xf32> -> vector<16x32xf32>
    %cst_38 = arith.constant dense<0xFF800000> : vector<16xf32>
    %89 = vector.multi_reduction <maximumf>, %88, %cst_38 [1] : vector<16x32xf32> to vector<16xf32>
    %90 = vector.shape_cast %89 : vector<16xf32> to vector<16x1xf32>
    %91 = vector.broadcast %90 : vector<16x1xf32> to vector<16x32xf32>
    %92 = arith.subf %88, %91 : vector<16x32xf32>
    %93 = math.exp %92 : vector<16x32xf32>
    %cst_39 = arith.constant dense<0.000000e+00> : vector<16xf32>
    %94 = vector.multi_reduction <add>, %93, %cst_39 [1] : vector<16x32xf32> to vector<16xf32>
    %95 = vector.shape_cast %94 : vector<16xf32> to vector<16x1xf32>
    %96 = tpu.reciprocal %95 {approx = true} : vector<16x1xf32> -> vector<16x1xf32>
    %97 = vector.broadcast %96 : vector<16x1xf32> to vector<16x32xf32>
    %98 = arith.mulf %93, %97 : vector<16x32xf32>
    %99 = arith.truncf %98 : vector<16x32xf32> to vector<16x32xbf16>
    %100 = vector.extract_strided_slice %64 {offsets = [0, 128], sizes = [32, 128], strides = [1, 1]} : vector<32x256xbf16> to vector<32x128xbf16>
    %cst_40 = arith.constant dense<0.000000e+00> : vector<16x128xf32>
    %101 = tpu.matmul %99, %100, %cst_40 {dimension_numbers = #tpu.dot_dimension_numbers<[1], [0], [0], [1], [0, 0, 1, 1], [], []>} : vector<16x32xbf16>, vector<32x128xbf16>, vector<16x128xf32> -> vector<16x128xf32>
    %102 = arith.truncf %101 : vector<16x128xf32> to vector<16x128xbf16>
    %103 = vector.extract_strided_slice %6 {offsets = [128, 0], sizes = [128, 256], strides = [1, 1]} : vector<256x256xbf16> to vector<128x256xbf16>
    %cst_41 = arith.constant dense<0.000000e+00> : vector<16x256xf32>
    %104 = tpu.matmul %102, %103, %cst_41 {dimension_numbers = #tpu.dot_dimension_numbers<[1], [0], [0], [1], [0, 0, 1, 1], [], []>} : vector<16x128xbf16>, vector<128x256xbf16>, vector<16x256xf32> -> vector<16x256xf32>
    %105 = arith.addf %85, %104 : vector<16x256xf32>
    %106 = arith.addf %8, %105 : vector<16x256xf32>
    %107 = vector.broadcast %7 : vector<1x256xf32> to vector<16x256xf32>
    %108 = arith.addf %106, %107 : vector<16x256xf32>
    %cst_42 = arith.constant dense<0.000000e+00> : vector<16xf32>
    %109 = vector.multi_reduction <add>, %108, %cst_42 [1] : vector<16x256xf32> to vector<16xf32>
    %110 = vector.shape_cast %109 : vector<16xf32> to vector<16x1xf32>
    %cst_43 = arith.constant 2.560000e+02 : f32
    %111 = vector.broadcast %cst_43 : f32 to vector<16x1xf32>
    %112 = arith.divf %110, %111 : vector<16x1xf32>
    %113 = vector.broadcast %112 : vector<16x1xf32> to vector<16x256xf32>
    %114 = arith.subf %108, %113 : vector<16x256xf32>
    %115 = arith.mulf %114, %114 : vector<16x256xf32>
    %cst_44 = arith.constant dense<0.000000e+00> : vector<16xf32>
    %116 = vector.multi_reduction <add>, %115, %cst_44 [1] : vector<16x256xf32> to vector<16xf32>
    %117 = vector.shape_cast %116 : vector<16xf32> to vector<16x1xf32>
    %cst_45 = arith.constant 2.560000e+02 : f32
    %118 = vector.broadcast %cst_45 : f32 to vector<16x1xf32>
    %119 = arith.divf %117, %118 : vector<16x1xf32>
    %cst_46 = arith.constant 9.99999974E-6 : f32
    %120 = vector.broadcast %cst_46 : f32 to vector<16x1xf32>
    %121 = arith.addf %119, %120 : vector<16x1xf32>
    %122 = math.rsqrt %121 : vector<16x1xf32>
    %123 = vector.broadcast %122 : vector<16x1xf32> to vector<16x256xf32>
    %124 = arith.mulf %114, %123 : vector<16x256xf32>
    %125 = vector.broadcast %0 : vector<1x256xf32> to vector<16x256xf32>
    %126 = arith.mulf %124, %125 : vector<16x256xf32>
    %127 = vector.broadcast %1 : vector<1x256xf32> to vector<16x256xf32>
    %128 = arith.addf %126, %127 : vector<16x256xf32>
    %129 = arith.truncf %128 : vector<16x256xf32> to vector<16x256xbf16>
    %cst_47 = arith.constant dense<0.000000e+00> : vector<16x256xf32>
    %130 = tpu.matmul %129, %2, %cst_47 {dimension_numbers = #tpu.dot_dimension_numbers<[1], [0], [0], [1], [0, 0, 1, 1], [], []>} : vector<16x256xbf16>, vector<256x256xbf16>, vector<16x256xf32> -> vector<16x256xf32>
    %131 = vector.broadcast %3 : vector<1x256xf32> to vector<16x256xf32>
    %132 = arith.addf %130, %131 : vector<16x256xf32>
    %cst_48 = arith.constant 0.0883883461 : f32
    %133 = vector.broadcast %cst_48 : f32 to vector<16x256xf32>
    %134 = arith.mulf %132, %133 : vector<16x256xf32>
    %cst_49 = arith.constant dense<0.000000e+00> : vector<16x512xf32>
    %135 = tpu.matmul %129, %4, %cst_49 {dimension_numbers = #tpu.dot_dimension_numbers<[1], [0], [0], [1], [0, 0, 1, 1], [], []>} : vector<16x256xbf16>, vector<256x512xbf16>, vector<16x512xf32> -> vector<16x512xf32>
    %136 = vector.broadcast %5 : vector<1x512xf32> to vector<16x512xf32>
    %137 = arith.addf %135, %136 : vector<16x512xf32>
    %138 = arith.truncf %134 : vector<16x256xf32> to vector<16x256xbf16>
    %139 = vector.extract_strided_slice %137 {offsets = [0, 0], sizes = [16, 256], strides = [1, 1]} : vector<16x512xf32> to vector<16x256xf32>
    %140 = arith.truncf %139 : vector<16x256xf32> to vector<16x256xbf16>
    %141 = vector.extract_strided_slice %137 {offsets = [0, 256], sizes = [16, 256], strides = [1, 1]} : vector<16x512xf32> to vector<16x256xf32>
    %142 = arith.truncf %141 : vector<16x256xf32> to vector<16x256xbf16>
    %cst_50 = arith.constant 0.000000e+00 : f32
    %143 = vector.broadcast %cst_50 : f32 to vector<16x256xf32>
    %144 = vector.extract_strided_slice %138 {offsets = [0, 0], sizes = [16, 128], strides = [1, 1]} : vector<16x256xbf16> to vector<16x128xbf16>
    %145 = vector.extract_strided_slice %140 {offsets = [0, 0], sizes = [16, 128], strides = [1, 1]} : vector<16x256xbf16> to vector<16x128xbf16>
    %cst_51 = arith.constant dense<0.000000e+00> : vector<16x16xf32>
    %146 = tpu.matmul %144, %145, %cst_51 {dimension_numbers = #tpu.dot_dimension_numbers<[1], [1], [0], [0], [0, 0, 1, 0], [], []>} : vector<16x128xbf16>, vector<16x128xbf16>, vector<16x16xf32> -> vector<16x16xf32>
    %cst_52 = arith.constant dense<0xFF800000> : vector<16xf32>
    %147 = vector.multi_reduction <maximumf>, %146, %cst_52 [1] : vector<16x16xf32> to vector<16xf32>
    %148 = vector.shape_cast %147 : vector<16xf32> to vector<16x1xf32>
    %149 = vector.broadcast %148 : vector<16x1xf32> to vector<16x16xf32>
    %150 = arith.subf %146, %149 : vector<16x16xf32>
    %151 = math.exp %150 : vector<16x16xf32>
    %cst_53 = arith.constant dense<0.000000e+00> : vector<16xf32>
    %152 = vector.multi_reduction <add>, %151, %cst_53 [1] : vector<16x16xf32> to vector<16xf32>
    %153 = vector.shape_cast %152 : vector<16xf32> to vector<16x1xf32>
    %154 = tpu.reciprocal %153 {approx = true} : vector<16x1xf32> -> vector<16x1xf32>
    %155 = vector.broadcast %154 : vector<16x1xf32> to vector<16x16xf32>
    %156 = arith.mulf %151, %155 : vector<16x16xf32>
    %157 = arith.truncf %156 : vector<16x16xf32> to vector<16x16xbf16>
    %158 = vector.extract_strided_slice %142 {offsets = [0, 0], sizes = [16, 128], strides = [1, 1]} : vector<16x256xbf16> to vector<16x128xbf16>
    %cst_54 = arith.constant dense<0.000000e+00> : vector<16x128xf32>
    %159 = tpu.matmul %157, %158, %cst_54 {dimension_numbers = #tpu.dot_dimension_numbers<[1], [0], [0], [1], [0, 0, 1, 1], [], []>} : vector<16x16xbf16>, vector<16x128xbf16>, vector<16x128xf32> -> vector<16x128xf32>
    %160 = arith.truncf %159 : vector<16x128xf32> to vector<16x128xbf16>
    %161 = vector.extract_strided_slice %6 {offsets = [0, 0], sizes = [128, 256], strides = [1, 1]} : vector<256x256xbf16> to vector<128x256xbf16>
    %cst_55 = arith.constant dense<0.000000e+00> : vector<16x256xf32>
    %162 = tpu.matmul %160, %161, %cst_55 {dimension_numbers = #tpu.dot_dimension_numbers<[1], [0], [0], [1], [0, 0, 1, 1], [], []>} : vector<16x128xbf16>, vector<128x256xbf16>, vector<16x256xf32> -> vector<16x256xf32>
    %163 = arith.addf %143, %162 : vector<16x256xf32>
    %164 = vector.extract_strided_slice %138 {offsets = [0, 128], sizes = [16, 128], strides = [1, 1]} : vector<16x256xbf16> to vector<16x128xbf16>
    %165 = vector.extract_strided_slice %140 {offsets = [0, 128], sizes = [16, 128], strides = [1, 1]} : vector<16x256xbf16> to vector<16x128xbf16>
    %cst_56 = arith.constant dense<0.000000e+00> : vector<16x16xf32>
    %166 = tpu.matmul %164, %165, %cst_56 {dimension_numbers = #tpu.dot_dimension_numbers<[1], [1], [0], [0], [0, 0, 1, 0], [], []>} : vector<16x128xbf16>, vector<16x128xbf16>, vector<16x16xf32> -> vector<16x16xf32>
    %cst_57 = arith.constant dense<0xFF800000> : vector<16xf32>
    %167 = vector.multi_reduction <maximumf>, %166, %cst_57 [1] : vector<16x16xf32> to vector<16xf32>
    %168 = vector.shape_cast %167 : vector<16xf32> to vector<16x1xf32>
    %169 = vector.broadcast %168 : vector<16x1xf32> to vector<16x16xf32>
    %170 = arith.subf %166, %169 : vector<16x16xf32>
    %171 = math.exp %170 : vector<16x16xf32>
    %cst_58 = arith.constant dense<0.000000e+00> : vector<16xf32>
    %172 = vector.multi_reduction <add>, %171, %cst_58 [1] : vector<16x16xf32> to vector<16xf32>
    %173 = vector.shape_cast %172 : vector<16xf32> to vector<16x1xf32>
    %174 = tpu.reciprocal %173 {approx = true} : vector<16x1xf32> -> vector<16x1xf32>
    %175 = vector.broadcast %174 : vector<16x1xf32> to vector<16x16xf32>
    %176 = arith.mulf %171, %175 : vector<16x16xf32>
    %177 = arith.truncf %176 : vector<16x16xf32> to vector<16x16xbf16>
    %178 = vector.extract_strided_slice %142 {offsets = [0, 128], sizes = [16, 128], strides = [1, 1]} : vector<16x256xbf16> to vector<16x128xbf16>
    %cst_59 = arith.constant dense<0.000000e+00> : vector<16x128xf32>
    %179 = tpu.matmul %177, %178, %cst_59 {dimension_numbers = #tpu.dot_dimension_numbers<[1], [0], [0], [1], [0, 0, 1, 1], [], []>} : vector<16x16xbf16>, vector<16x128xbf16>, vector<16x128xf32> -> vector<16x128xf32>
    %180 = arith.truncf %179 : vector<16x128xf32> to vector<16x128xbf16>
    %181 = vector.extract_strided_slice %6 {offsets = [128, 0], sizes = [128, 256], strides = [1, 1]} : vector<256x256xbf16> to vector<128x256xbf16>
    %cst_60 = arith.constant dense<0.000000e+00> : vector<16x256xf32>
    %182 = tpu.matmul %180, %181, %cst_60 {dimension_numbers = #tpu.dot_dimension_numbers<[1], [0], [0], [1], [0, 0, 1, 1], [], []>} : vector<16x128xbf16>, vector<128x256xbf16>, vector<16x256xf32> -> vector<16x256xf32>
    %183 = arith.addf %163, %182 : vector<16x256xf32>
    %184 = arith.addf %108, %183 : vector<16x256xf32>
    %185 = vector.broadcast %7 : vector<1x256xf32> to vector<16x256xf32>
    %186 = arith.addf %184, %185 : vector<16x256xf32>
    %c0_61 = arith.constant 0 : index
    %c0_62 = arith.constant 0 : index
    %187 = vector.load %arg11[%c0_61, %c0_62] : memref<16x256xf32, #tpu.memory_space<vmem>>, vector<16x256xf32>
    tpu.vector_store %arg11[%c0_61, %c0_62], %186 {strides = array<i32>} : memref<16x256xf32, #tpu.memory_space<vmem>>, vector<16x256xf32>,
    return
  }
  func.func @transform_0(%arg0: i32) -> (i32, i32) {
    %c0_i32 = arith.constant 0 : i32
    %c0_i32_0 = arith.constant 0 : i32
    return %arg0, %c0_i32 : i32, i32
  }
  func.func @transform_1(%arg0: i32) -> (i32, i32) {
    %c0_i32 = arith.constant 0 : i32
    %c0_i32_0 = arith.constant 0 : i32
    %c0_i32_1 = arith.constant 0 : i32
    return %c0_i32, %c0_i32_0 : i32, i32
  }
  func.func @transform_2(%arg0: i32) -> (i32, i32) {
    %c0_i32 = arith.constant 0 : i32
    %c0_i32_0 = arith.constant 0 : i32
    %c0_i32_1 = arith.constant 0 : i32
    return %c0_i32, %c0_i32_0 : i32, i32
  }
  func.func @transform_3(%arg0: i32) -> (i32, i32) {
    %c0_i32 = arith.constant 0 : i32
    %c0_i32_0 = arith.constant 0 : i32
    %c0_i32_1 = arith.constant 0 : i32
    return %c0_i32, %c0_i32_0 : i32, i32
  }
  func.func @transform_4(%arg0: i32) -> (i32, i32) {
    %c0_i32 = arith.constant 0 : i32
    %c0_i32_0 = arith.constant 0 : i32
    %c0_i32_1 = arith.constant 0 : i32
    return %c0_i32, %c0_i32_0 : i32, i32
  }
  func.func @transform_5(%arg0: i32) -> (i32, i32) {
    %c0_i32 = arith.constant 0 : i32
    %c0_i32_0 = arith.constant 0 : i32
    %c0_i32_1 = arith.constant 0 : i32
    return %c0_i32, %c0_i32_0 : i32, i32
  }
  func.func @transform_6(%arg0: i32) -> (i32, i32) {
    %c0_i32 = arith.constant 0 : i32
    %c0_i32_0 = arith.constant 0 : i32
    %c0_i32_1 = arith.constant 0 : i32
    return %c0_i32, %c0_i32_0 : i32, i32
  }
  func.func @transform_7(%arg0: i32) -> (i32, i32) {
    %c0_i32 = arith.constant 0 : i32
    %c0_i32_0 = arith.constant 0 : i32
    %c0_i32_1 = arith.constant 0 : i32
    return %c0_i32, %c0_i32_0 : i32, i32
  }
  func.func @transform_8(%arg0: i32) -> (i32, i32) {
    %c0_i32 = arith.constant 0 : i32
    %c0_i32_0 = arith.constant 0 : i32
    %c0_i32_1 = arith.constant 0 : i32
    return %c0_i32, %c0_i32_0 : i32, i32
  }
  func.func @transform_9(%arg0: i32) -> (i32, i32) {
    %c0_i32 = arith.constant 0 : i32
    %c0_i32_0 = arith.constant 0 : i32
    %c0_i32_1 = arith.constant 0 : i32
    return %c0_i32, %c0_i32_0 : i32, i32
  }
  func.func @transform_10(%arg0: i32) -> (i32, i32) {
    %c0_i32 = arith.constant 0 : i32
    %c0_i32_0 = arith.constant 0 : i32
    return %arg0, %c0_i32 : i32, i32
  }
}

</mosaic_0001>

<llo_original>
// kernel: tpu_custom_call.1
$region0: #{tpu_custom_call.1}
  #allocation0 [shape = 'u32[]', space=smem, size = 0x4, offset = 0x4, fixed_abs, tag = 'smem constant byte address 0x4 - core index']
  #allocation1 [shape = 'u32[72,128]{1,0:T(1,128)}', space=vmem, size = 0x9000, scoped, tag = 'internal scratch']
  %s0 = inlined_call_operand.hbm [shape: f32[64,256], index: 0, kind: input, shape index: {}]
  %s1 = inlined_call_operand.hbm [shape: f32[16,256], index: 1, kind: input, shape index: {}]
  %s2 = inlined_call_operand.hbm [shape: f32[1,256], index: 2, kind: input, shape index: {}]
  %s3 = inlined_call_operand.vmem [shape: f32[1,256], index: 3, kind: input, shape index: {}]
  %s4 = inlined_call_operand.hbm [shape: bf16[256,256], index: 4, kind: input, shape index: {}]
  %s5 = inlined_call_operand.hbm [shape: f32[1,256], index: 5, kind: input, shape index: {}]
  %s6 = inlined_call_operand.hbm [shape: bf16[256,512], index: 6, kind: input, shape index: {}]
  %s7 = inlined_call_operand.vmem [shape: f32[1,512], index: 7, kind: input, shape index: {}]
  %s8 = inlined_call_operand.hbm [shape: bf16[256,256], index: 8, kind: input, shape index: {}]
  %s9 = inlined_call_operand.vmem [shape: f32[1,256], index: 9, kind: input, shape index: {}]
  %s10 = inlined_call_operand.hbm [shape: f32[32,256], index: 10, kind: output, shape index: {}]
  %s11 = sld [smem:[#allocation0]]
  $region101: #{tpu_custom_call.1} parent=0
    _
  %s13 = ssub.s32 1, %s11
  %s14 = scalar_select 0, %s13, %s11
  $region1: #{tpu_custom_call.1} parent=0
    #allocation2 [shape = 'u8[65536]{0}', space=vmem, size = 0x10000, scoped, tag = 'input window, operand 0']
    #allocation3 [shape = 's32[2]{0}', space=sflag, size = 0x8, scoped, tag = 'scoped memory for tpu_custom_call.1']
    #allocation4 [shape = 's32[2]{0}', space=sflag, size = 0x8, scoped, tag = 'scoped memory for tpu_custom_call.1']
    #allocation5 [shape = 'u8[16384]{0}', space=vmem, size = 0x4000, scoped, tag = 'input window, operand 1, single buffered']
    #allocation6 [shape = 's32[1]{0}', space=sflag, size = 0x4, scoped, tag = 'scoped memory for tpu_custom_call.1']
    #allocation7 [shape = 'u8[1024]{0}', space=vmem, size = 0x400, scoped, tag = 'input window, operand 2, single buffered']
    #allocation8 [shape = 'u8[131072]{0}', space=vmem, size = 0x20000, scoped, tag = 'input window, operand 4, single buffered']
    #allocation9 [shape = 's32[1]{0}', space=sflag, size = 0x4, scoped, tag = 'scoped memory for tpu_custom_call.1']
    #allocation10 [shape = 'u8[1024]{0}', space=vmem, size = 0x400, scoped, tag = 'input window, operand 5, single buffered']
    #allocation11 [shape = 'u8[262144]{0}', space=vmem, size = 0x40000, scoped, tag = 'input window, operand 6, single buffered']
    #allocation12 [shape = 's32[1]{0}', space=sflag, size = 0x4, scoped, tag = 'scoped memory for tpu_custom_call.1']
    #allocation13 [shape = 'u8[131072]{0}', space=vmem, size = 0x20000, scoped, tag = 'input window, operand 8, single buffered']
    #allocation14 [shape = 'u8[32768]{0}', space=vmem, size = 0x8000, scoped, tag = 'output window, operand 0']
    %15 = vsyncpa [#allocation3], 0
    %s16 = scalar_lea.sflag [#allocation3], 1
    %17 = vsyncpa %s16, 0
    %18 = vsyncpa [#allocation6], 0
    %19 = vsyncpa [#allocation9], 0
    %20 = vsyncpa [#allocation12], 0
    %21 = vsyncpa [#allocation4], 0
    %s22 = scalar_lea.sflag [#allocation4], 1
    %23 = vsyncpa %s22, 0
    loop: start=0, step=1, limit=4
    $region2: #{tpu_custom_call.1} parent=1 // loop_pre_header
      _
    $region3: #{tpu_custom_call.1} parent=1 // loop_header
      %s25 = sphi 0, %s29
      %p26 = scmp.ge.s32.totalorder %s25, 4
      %s35 = sphi 0, %s37
      %s38 = sphi 0, %s35
      %s39 = sphi 0, %s38
      %s55 = sphi 0, %s39
      %s59 = sphi 0, %s59
      %s61 = sphi 0, %s59
      %s62 = sphi 0, %s61
      %s76 = sphi 0, %s62
      %s80 = sphi 0, %s80
      %s82 = sphi 0, %s80
      %s83 = sphi 0, %s82
      %s97 = sphi 0, %s83
      %s101 = sphi 0, %s101
      %s103 = sphi 0, %s101
      %s104 = sphi 0, %s103
      %s118 = sphi 0, %s104
      %s122 = sphi 0, %s122
      %s124 = sphi 0, %s122
      %s125 = sphi 0, %s124
      %s139 = sphi 0, %s125
      %s143 = sphi 0, %s143
      %s145 = sphi 0, %s143
      %s146 = sphi 0, %s145
      %s160 = sphi 0, %s146
      %s164 = sphi 0, %s164
      %s166 = sphi 0, %s164
      %s167 = sphi 0, %s166
      %s181 = sphi 0, %s167
      %s185 = sphi 0, %s185
      %s187 = sphi 0, %s185
      %s188 = sphi 0, %s187
      %s202 = sphi 0, %s188
      %s206 = sphi 0, %s206
      %s208 = sphi 0, %s206
      %s209 = sphi 0, %s208
      %s223 = sphi 0, %s209
      %s227 = sphi 0, %s227
      %s229 = sphi 0, %s227
      %s230 = sphi 0, %s229
      %s244 = sphi 0, %s230
      %s250 = sphi 0, %s252
      %s253 = sphi 0, %s250
      %s254 = sphi 0, %s253
      %s270 = sphi 0, %s254
    $region4: #{tpu_custom_call.1} parent=1 // loop_header_branch
      %28 = sbr.rel (%p26) target = $region8
    $region5: #{tpu_custom_call.1} parent=1 // loop_body
      %s30 = ssub.s32 %s25, 1
      %s31 = ssub.s32 %s25, 2
      %s32 = sadd.s32 %s25, 1
      %s33 = ssub.s32 %s25, %s32
      %p34 = scmp.eq.s32.totalorder %s33, 0
      %s36 = sadd.s32 %s35, 1
      %s37 = scalar_select %p34, %s35, %s36
      %p40 = pneg %p34
      %p41 = scmp.eq.s32.totalorder %s25, 1
      %p42 = por %p40, %p41
      %p43 = scmp.ne.s32.totalorder %s35, %s38
      %p44 = scmp.eq.s32.totalorder %s25, 0
      %p45 = por %p43, %p44
      %p46 = scmp.ne.s32.totalorder %s35, %s38
      %p47 = scmp.eq.s32.totalorder %s30, 1
      %p48 = por %p46, %p47
      %p49 = scmp.ne.s32.totalorder %s38, %s39
      %p50 = scmp.eq.s32.totalorder %s30, 0
      %p51 = por %p49, %p50
      %p52 = scmp.ne.s32.totalorder %s38, %s39
      %p53 = scmp.eq.s32.totalorder %s31, 1
      %p54 = por %p52, %p53
      %p56 = scmp.ne.s32.totalorder %s39, %s55
      %p57 = scmp.eq.s32.totalorder %s31, 0
      %p58 = por %p56, %p57
      %s60 = sadd.s32 %s59, 1
      %p63 = scmp.eq.s32.totalorder %s25, 1
      %p64 = scmp.ne.s32.totalorder %s59, %s61
      %p65 = scmp.eq.s32.totalorder %s25, 0
      %p66 = por %p64, %p65
      %p67 = scmp.ne.s32.totalorder %s59, %s61
      %p68 = scmp.eq.s32.totalorder %s30, 1
      %p69 = por %p67, %p68
      %p70 = scmp.ne.s32.totalorder %s61, %s62
      %p71 = scmp.eq.s32.totalorder %s30, 0
      %p72 = por %p70, %p71
      %p73 = scmp.ne.s32.totalorder %s61, %s62
      %p74 = scmp.eq.s32.totalorder %s31, 1
      %p75 = por %p73, %p74
      %p77 = scmp.ne.s32.totalorder %s62, %s76
      %p78 = scmp.eq.s32.totalorder %s31, 0
      %p79 = por %p77, %p78
      %s81 = sadd.s32 %s80, 1
      %p84 = scmp.eq.s32.totalorder %s25, 1
      %p85 = scmp.ne.s32.totalorder %s80, %s82
      %p86 = scmp.eq.s32.totalorder %s25, 0
      %p87 = por %p85, %p86
      %p88 = scmp.ne.s32.totalorder %s80, %s82
      %p89 = scmp.eq.s32.totalorder %s30, 1
      %p90 = por %p88, %p89
      %p91 = scmp.ne.s32.totalorder %s82, %s83
      %p92 = scmp.eq.s32.totalorder %s30, 0
      %p93 = por %p91, %p92
      %p94 = scmp.ne.s32.totalorder %s82, %s83
      %p95 = scmp.eq.s32.totalorder %s31, 1
      %p96 = por %p94, %p95
      %p98 = scmp.ne.s32.totalorder %s83, %s97
      %p99 = scmp.eq.s32.totalorder %s31, 0
      %p100 = por %p98, %p99
      %s102 = sadd.s32 %s101, 1
      %p105 = scmp.eq.s32.totalorder %s25, 1
      %p106 = scmp.ne.s32.totalorder %s101, %s103
      %p107 = scmp.eq.s32.totalorder %s25, 0
      %p108 = por %p106, %p107
      %p109 = scmp.ne.s32.totalorder %s101, %s103
      %p110 = scmp.eq.s32.totalorder %s30, 1
      %p111 = por %p109, %p110
      %p112 = scmp.ne.s32.totalorder %s103, %s104
      %p113 = scmp.eq.s32.totalorder %s30, 0
      %p114 = por %p112, %p113
      %p115 = scmp.ne.s32.totalorder %s103, %s104
      %p116 = scmp.eq.s32.totalorder %s31, 1
      %p117 = por %p115, %p116
      %p119 = scmp.ne.s32.totalorder %s104, %s118
      %p120 = scmp.eq.s32.totalorder %s31, 0
      %p121 = por %p119, %p120
      %s123 = sadd.s32 %s122, 1
      %p126 = scmp.eq.s32.totalorder %s25, 1
      %p127 = scmp.ne.s32.totalorder %s122, %s124
      %p128 = scmp.eq.s32.totalorder %s25, 0
      %p129 = por %p127, %p128
      %p130 = scmp.ne.s32.totalorder %s122, %s124
      %p131 = scmp.eq.s32.totalorder %s30, 1
      %p132 = por %p130, %p131
      %p133 = scmp.ne.s32.totalorder %s124, %s125
      %p134 = scmp.eq.s32.totalorder %s30, 0
      %p135 = por %p133, %p134
      %p136 = scmp.ne.s32.totalorder %s124, %s125
      %p137 = scmp.eq.s32.totalorder %s31, 1
      %p138 = por %p136, %p137
      %p140 = scmp.ne.s32.totalorder %s125, %s139
      %p141 = scmp.eq.s32.totalorder %s31, 0
      %p142 = por %p140, %p141
      %s144 = sadd.s32 %s143, 1
      %p147 = scmp.eq.s32.totalorder %s25, 1
      %p148 = scmp.ne.s32.totalorder %s143, %s145
      %p149 = scmp.eq.s32.totalorder %s25, 0
      %p150 = por %p148, %p149
      %p151 = scmp.ne.s32.totalorder %s143, %s145
      %p152 = scmp.eq.s32.totalorder %s30, 1
      %p153 = por %p151, %p152
      %p154 = scmp.ne.s32.totalorder %s145, %s146
      %p155 = scmp.eq.s32.totalorder %s30, 0
      %p156 = por %p154, %p155
      %p157 = scmp.ne.s32.totalorder %s145, %s146
      %p158 = scmp.eq.s32.totalorder %s31, 1
      %p159 = por %p157, %p158
      %p161 = scmp.ne.s32.totalorder %s146, %s160
      %p162 = scmp.eq.s32.totalorder %s31, 0
      %p163 = por %p161, %p162
      %s165 = sadd.s32 %s164, 1
      %p168 = scmp.eq.s32.totalorder %s25, 1
      %p169 = scmp.ne.s32.totalorder %s164, %s166
      %p170 = scmp.eq.s32.totalorder %s25, 0
      %p171 = por %p169, %p170
      %p172 = scmp.ne.s32.totalorder %s164, %s166
      %p173 = scmp.eq.s32.totalorder %s30, 1
      %p174 = por %p172, %p173
      %p175 = scmp.ne.s32.totalorder %s166, %s167
      %p176 = scmp.eq.s32.totalorder %s30, 0
      %p177 = por %p175, %p176
      %p178 = scmp.ne.s32.totalorder %s166, %s167
      %p179 = scmp.eq.s32.totalorder %s31, 1
      %p180 = por %p178, %p179
      %p182 = scmp.ne.s32.totalorder %s167, %s181
      %p183 = scmp.eq.s32.totalorder %s31, 0
      %p184 = por %p182, %p183
      %s186 = sadd.s32 %s185, 1
      %p189 = scmp.eq.s32.totalorder %s25, 1
      %p190 = scmp.ne.s32.totalorder %s185, %s187
      %p191 = scmp.eq.s32.totalorder %s25, 0
      %p192 = por %p190, %p191
      %p193 = scmp.ne.s32.totalorder %s185, %s187
      %p194 = scmp.eq.s32.totalorder %s30, 1
      %p195 = por %p193, %p194
      %p196 = scmp.ne.s32.totalorder %s187, %s188
      %p197 = scmp.eq.s32.totalorder %s30, 0
      %p198 = por %p196, %p197
      %p199 = scmp.ne.s32.totalorder %s187, %s188
      %p200 = scmp.eq.s32.totalorder %s31, 1
      %p201 = por %p199, %p200
      %p203 = scmp.ne.s32.totalorder %s188, %s202
      %p204 = scmp.eq.s32.totalorder %s31, 0
      %p205 = por %p203, %p204
      %s207 = sadd.s32 %s206, 1
      %p210 = scmp.eq.s32.totalorder %s25, 1
      %p211 = scmp.ne.s32.totalorder %s206, %s208
      %p212 = scmp.eq.s32.totalorder %s25, 0
      %p213 = por %p211, %p212
      %p214 = scmp.ne.s32.totalorder %s206, %s208
      %p215 = scmp.eq.s32.totalorder %s30, 1
      %p216 = por %p214, %p215
      %p217 = scmp.ne.s32.totalorder %s208, %s209
      %p218 = scmp.eq.s32.totalorder %s30, 0
      %p219 = por %p217, %p218
      %p220 = scmp.ne.s32.totalorder %s208, %s209
      %p221 = scmp.eq.s32.totalorder %s31, 1
      %p222 = por %p220, %p221
      %p224 = scmp.ne.s32.totalorder %s209, %s223
      %p225 = scmp.eq.s32.totalorder %s31, 0
      %p226 = por %p224, %p225
      %s228 = sadd.s32 %s227, 1
      %p231 = scmp.eq.s32.totalorder %s25, 1
      %p232 = scmp.ne.s32.totalorder %s227, %s229
      %p233 = scmp.eq.s32.totalorder %s25, 0
      %p234 = por %p232, %p233
      %p235 = scmp.ne.s32.totalorder %s227, %s229
      %p236 = scmp.eq.s32.totalorder %s30, 1
      %p237 = por %p235, %p236
      %p238 = scmp.ne.s32.totalorder %s229, %s230
      %p239 = scmp.eq.s32.totalorder %s30, 0
      %p240 = por %p238, %p239
      %p241 = scmp.ne.s32.totalorder %s229, %s230
      %p242 = scmp.eq.s32.totalorder %s31, 1
      %p243 = por %p241, %p242
      %p245 = scmp.ne.s32.totalorder %s230, %s244
      %p246 = scmp.eq.s32.totalorder %s31, 0
      %p247 = por %p245, %p246
      %s248 = ssub.s32 %s25, %s32
      %p249 = scmp.eq.s32.totalorder %s248, 0
      %s251 = sadd.s32 %s250, 1
      %s252 = scalar_select %p249, %s250, %s251
      %p255 = pneg %p249
      %p256 = scmp.eq.s32.totalorder %s25, 1
      %p257 = por %p255, %p256
      %p258 = scmp.ne.s32.totalorder %s250, %s253
      %p259 = scmp.eq.s32.totalorder %s25, 0
      %p260 = por %p258, %p259
      %p261 = scmp.ne.s32.totalorder %s250, %s253
      %p262 = scmp.eq.s32.totalorder %s30, 1
      %p263 = por %p261, %p262
      %p264 = scmp.ne.s32.totalorder %s253, %s254
      %p265 = scmp.eq.s32.totalorder %s30, 0
      %p266 = por %p264, %p265
      %p267 = scmp.ne.s32.totalorder %s253, %s254
      %p268 = scmp.eq.s32.totalorder %s31, 1
      %p269 = por %p267, %p268
      %p271 = scmp.ne.s32.totalorder %s254, %s270
      %p272 = scmp.eq.s32.totalorder %s31, 0
      %p273 = por %p271, %p272
      %p274 = scmp.le.s32.totalorder 1, %s25
      %p275 = scmp.lt.s32.totalorder %s25, 3
      %p276 = pnand %p274, %p275
      %p277 = pneg %p276
      // Predicated region
      $region9: #{tpu_custom_call.1} parent=5 // pred_check
        _
      $region10: #{tpu_custom_call.1} parent=5 // pred_check_branch
        %279 = sbr.rel (%p276) target = $region12
      $region11: #{tpu_custom_call.1} parent=5 // pred_region
        %s280 = ssub.s32 %s25, 1
        // Predicated region
        $region13: #{tpu_custom_call.1} parent=11 // pred_check
          %p281 = pneg %p72
        $region14: #{tpu_custom_call.1} parent=11 // pred_check_branch
          %283 = sbr.rel (%p281) target = $region16
        $region15: #{tpu_custom_call.1} parent=11 // pred_region
          %285 = vsyncadd [#allocation6], 0
          %s286 = sshll.u32 %s1, 4
          %s287 = int_to_ptr.hbm [resolvable:$true] %s286
          %s288 = sshll.u32 [#allocation5], 4
          %s289 = int_to_ptr.vmem [resolvable:$true] %s288
          %294 = dma.hbm_to_vmem [thread:$0]  %s287, 512, %s289, [#allocation6], 256, 256, 16
        $region16: #{tpu_custom_call.1} parent=11 // pred_fallthru
          _
        // Predicated region
        $region17: #{tpu_custom_call.1} parent=11 // pred_check
          %p295 = pneg %p93
        $region18: #{tpu_custom_call.1} parent=11 // pred_check_branch
          %297 = sbr.rel (%p295) target = $region20
        $region19: #{tpu_custom_call.1} parent=11 // pred_region
          %299 = vsyncadd [#allocation6], 0
          %s301 = sshll.u32 %s2, 4
          %s302 = int_to_ptr.hbm [resolvable:$true] %s301
          %s303 = sshll.u32 [#allocation7], 4
          %s304 = int_to_ptr.vmem [resolvable:$true] %s303
          %306 = dma.hbm_to_vmem [thread:$0]  %s302, 32, %s304, [#allocation6]
        $region20: #{tpu_custom_call.1} parent=11 // pred_fallthru
          _
        // Predicated region
        $region21: #{tpu_custom_call.1} parent=11 // pred_check
          %p307 = pneg %p114
        $region22: #{tpu_custom_call.1} parent=11 // pred_check_branch
          %309 = sbr.rel (%p307) target = $region24
        $region23: #{tpu_custom_call.1} parent=11 // pred_region
          _
        $region24: #{tpu_custom_call.1} parent=11 // pred_fallthru
          _
        // Predicated region
        $region25: #{tpu_custom_call.1} parent=11 // pred_check
          %p310 = pneg %p135
        $region26: #{tpu_custom_call.1} parent=11 // pred_check_branch
          %312 = sbr.rel (%p310) target = $region28
        $region27: #{tpu_custom_call.1} parent=11 // pred_region
          %314 = vsyncadd [#allocation9], 0
          %s315 = sshll.u32 %s4, 4
          %s316 = int_to_ptr.hbm [resolvable:$true] %s315
          %s317 = sshll.u32 [#allocation8], 4
          %s318 = int_to_ptr.vmem [resolvable:$true] %s317
          %323 = dma.hbm_to_vmem [thread:$0]  %s316, 4096, %s318, [#allocation9], 128, 128, 8
        $region28: #{tpu_custom_call.1} parent=11 // pred_fallthru
          _
        // Predicated region
        $region29: #{tpu_custom_call.1} parent=11 // pred_check
          %p324 = pneg %p156
        $region30: #{tpu_custom_call.1} parent=11 // pred_check_branch
          %326 = sbr.rel (%p324) target = $region32
        $region31: #{tpu_custom_call.1} parent=11 // pred_region
          %328 = vsyncadd [#allocation9], 0
          %s330 = sshll.u32 %s5, 4
          %s331 = int_to_ptr.hbm [resolvable:$true] %s330
          %s332 = sshll.u32 [#allocation10], 4
          %s333 = int_to_ptr.vmem [resolvable:$true] %s332
          %335 = dma.hbm_to_vmem [thread:$0]  %s331, 32, %s333, [#allocation9]
        $region32: #{tpu_custom_call.1} parent=11 // pred_fallthru
          _
        // Predicated region
        $region33: #{tpu_custom_call.1} parent=11 // pred_check
          %p336 = pneg %p177
        $region34: #{tpu_custom_call.1} parent=11 // pred_check_branch
          %338 = sbr.rel (%p336) target = $region36
        $region35: #{tpu_custom_call.1} parent=11 // pred_region
          %340 = vsyncadd [#allocation12], 0
          %s341 = sshll.u32 %s6, 4
          %s342 = int_to_ptr.hbm [resolvable:$true] %s341
          %s343 = sshll.u32 [#allocation11], 4
          %s344 = int_to_ptr.vmem [resolvable:$true] %s343
          %349 = dma.hbm_to_vmem [thread:$0]  %s342, 8192, %s344, [#allocation12], 256, 256, 16
        $region36: #{tpu_custom_call.1} parent=11 // pred_fallthru
          _
        // Predicated region
        $region37: #{tpu_custom_call.1} parent=11 // pred_check
          %p350 = pneg %p198
        $region38: #{tpu_custom_call.1} parent=11 // pred_check_branch
          %352 = sbr.rel (%p350) target = $region40
        $region39: #{tpu_custom_call.1} parent=11 // pred_region
          _
        $region40: #{tpu_custom_call.1} parent=11 // pred_fallthru
          _
        // Predicated region
        $region41: #{tpu_custom_call.1} parent=11 // pred_check
          %p353 = pneg %p219
        $region42: #{tpu_custom_call.1} parent=11 // pred_check_branch
          %355 = sbr.rel (%p353) target = $region44
        $region43: #{tpu_custom_call.1} parent=11 // pred_region
          %357 = vsyncadd [#allocation12], 0
          %s358 = sshll.u32 %s8, 4
          %s359 = int_to_ptr.hbm [resolvable:$true] %s358
          %s360 = sshll.u32 [#allocation13], 4
          %s361 = int_to_ptr.vmem [resolvable:$true] %s360
          %366 = dma.hbm_to_vmem [thread:$0]  %s359, 4096, %s361, [#allocation12], 128, 128, 8
        $region44: #{tpu_custom_call.1} parent=11 // pred_fallthru
          _
        // Predicated region
        $region45: #{tpu_custom_call.1} parent=11 // pred_check
          %p367 = pneg %p240
        $region46: #{tpu_custom_call.1} parent=11 // pred_check_branch
          %369 = sbr.rel (%p367) target = $region48
        $region47: #{tpu_custom_call.1} parent=11 // pred_region
          _
        $region48: #{tpu_custom_call.1} parent=11 // pred_fallthru
          _
      $region12: #{tpu_custom_call.1} parent=5 // pred_fallthru
        _
      %p370 = scmp.lt.s32.totalorder %s25, 2
      // Predicated region
      $region49: #{tpu_custom_call.1} parent=5 // pred_check
        %p371 = pneg %p370
      $region50: #{tpu_custom_call.1} parent=5 // pred_check_branch
        %373 = sbr.rel (%p371) target = $region52
      $region51: #{tpu_custom_call.1} parent=5 // pred_region
        // Predicated region
        $region53: #{tpu_custom_call.1} parent=51 // pred_check
          %p374 = pneg %p45
        $region54: #{tpu_custom_call.1} parent=51 // pred_check_branch
          %376 = sbr.rel (%p374) target = $region56
        $region55: #{tpu_custom_call.1} parent=51 // pred_region
          %s377 = sand.u32 %s35, 1
          %s378 = scalar_lea.sflag [#allocation3], %s377
          %s379 = sand.u32 %s35, 1
          %s380 = smul.addr %s379, 64
          %s381 = scalar_lea.vmem [#allocation2], %s380
          %s382 = smul.u32 4, %s25
          %384 = vsyncadd %s378, 0
          %s385 = smul.addr %s382, 2
          %s386 = smul.addr %s385, 8
          %s387 = scalar_lea.hbm %s0, %s386
          %s388 = sshll.u32 %s387, 4
          %s389 = int_to_ptr.hbm [resolvable:$true] %s388
          %s390 = sshll.u32 %s381, 4
          %s391 = int_to_ptr.vmem [resolvable:$true] %s390
          %396 = dma.hbm_to_vmem [thread:$0]  %s389, 1024, %s391, %s378, 256, 256, 16
        $region56: #{tpu_custom_call.1} parent=51 // pred_fallthru
          _
      $region52: #{tpu_custom_call.1} parent=5 // pred_fallthru
        _
      %p397 = scmp.le.s32.totalorder 1, %s25
      %p398 = scmp.lt.s32.totalorder %s25, 3
      %p399 = pnand %p397, %p398
      %p400 = pneg %p399
      // Predicated region
      $region57: #{tpu_custom_call.1} parent=5 // pred_check
        _
      $region58: #{tpu_custom_call.1} parent=5 // pred_check_branch
        %402 = sbr.rel (%p399) target = $region60
      $region59: #{tpu_custom_call.1} parent=5 // pred_region
        %s403 = ssub.s32 %s25, 1
        %s404 = sand.u32 %s38, 1
        %s405 = scalar_lea.sflag [#allocation3], %s404
        %s406 = sand.u32 %s38, 1
        %s407 = smul.addr %s406, 64
        %s408 = scalar_lea.vmem [#allocation2], %s407
        // Predicated region
        $region61: #{tpu_custom_call.1} parent=59 // pred_check
          %p409 = pneg %p51
        $region62: #{tpu_custom_call.1} parent=59 // pred_check_branch
          %411 = sbr.rel (%p409) target = $region64
        $region63: #{tpu_custom_call.1} parent=59 // pred_region
          %413 = dma.done %s405, 1024
        $region64: #{tpu_custom_call.1} parent=59 // pred_fallthru
          _
        // Predicated region
        $region65: #{tpu_custom_call.1} parent=59 // pred_check
          %p414 = pneg %p72
        $region66: #{tpu_custom_call.1} parent=59 // pred_check_branch
          %416 = sbr.rel (%p414) target = $region68
        $region67: #{tpu_custom_call.1} parent=59 // pred_region
          %418 = dma.done [#allocation6], 512
        $region68: #{tpu_custom_call.1} parent=59 // pred_fallthru
          _
        // Predicated region
        $region69: #{tpu_custom_call.1} parent=59 // pred_check
          %p419 = pneg %p93
        $region70: #{tpu_custom_call.1} parent=59 // pred_check_branch
          %421 = sbr.rel (%p419) target = $region72
        $region71: #{tpu_custom_call.1} parent=59 // pred_region
          %423 = dma.done [#allocation6], 32
        $region72: #{tpu_custom_call.1} parent=59 // pred_fallthru
          _
        // Predicated region
        $region73: #{tpu_custom_call.1} parent=59 // pred_check
          %p424 = pneg %p135
        $region74: #{tpu_custom_call.1} parent=59 // pred_check_branch
          %426 = sbr.rel (%p424) target = $region76
        $region75: #{tpu_custom_call.1} parent=59 // pred_region
          %428 = dma.done [#allocation9], 4096
        $region76: #{tpu_custom_call.1} parent=59 // pred_fallthru
          _
        // Predicated region
        $region77: #{tpu_custom_call.1} parent=59 // pred_check
          %p429 = pneg %p156
        $region78: #{tpu_custom_call.1} parent=59 // pred_check_branch
          %431 = sbr.rel (%p429) target = $region80
        $region79: #{tpu_custom_call.1} parent=59 // pred_region
          %433 = dma.done [#allocation9], 32
        $region80: #{tpu_custom_call.1} parent=59 // pred_fallthru
          _
        // Predicated region
        $region81: #{tpu_custom_call.1} parent=59 // pred_check
          %p434 = pneg %p177
        $region82: #{tpu_custom_call.1} parent=59 // pred_check_branch
          %436 = sbr.rel (%p434) target = $region84
        $region83: #{tpu_custom_call.1} parent=59 // pred_region
          %438 = dma.done [#allocation12], 8192
        $region84: #{tpu_custom_call.1} parent=59 // pred_fallthru
          _
        // Predicated region
        $region85: #{tpu_custom_call.1} parent=59 // pred_check
          %p439 = pneg %p219
        $region86: #{tpu_custom_call.1} parent=59 // pred_check_branch
          %441 = sbr.rel (%p439) target = $region88
        $region87: #{tpu_custom_call.1} parent=59 // pred_region
          %443 = dma.done [#allocation12], 4096
        $region88: #{tpu_custom_call.1} parent=59 // pred_fallthru
          _
        %s444 = sand.u32 %s38, 1
        %s445 = scalar_lea.sflag [#allocation3], %s444
        %s446 = sand.u32 %s38, 1
        %s447 = smul.addr %s446, 64
        %s448 = scalar_lea.vmem [#allocation2], %s447
        %p449 = pneg %p51
        %p450 = pneg %p48
        %p451 = pneg %p72
        %p452 = pneg %p69
        %p453 = pneg %p93
        %p454 = pneg %p90
        %p455 = pneg %p114
        %p456 = pneg %p111
        %p457 = pneg %p135
        %p458 = pneg %p132
        %p459 = pneg %p156
        %p460 = pneg %p153
        %p461 = pneg %p177
        %p462 = pneg %p174
        %p463 = pneg %p198
        %p464 = pneg %p195
        %p465 = pneg %p219
        %p466 = pneg %p216
        %p467 = pneg %p240
        %p468 = pneg %p237
        %p469 = pneg %p266
        %p470 = pneg %p263
        %s471 = sand.u32 %s253, 1
        %s472 = scalar_lea.sflag [#allocation4], %s471
        %s473 = sand.u32 %s253, 1
        %s474 = smul.addr %s473, 32
        %s475 = scalar_lea.vmem [#allocation14], %s474
        %s476 = smul.u32 4, %s30
        %s477 = smul.u32 2, %s30
        %v479 = vld [vmem:[#allocation7] sm:$0x3]
        %v480 = vld [vmem:[%s3] sm:$0x3]
        %v481 = vld [vmem:[#allocation8] sm:$0xff]
        %v482 = vld [vmem:[#allocation8 + $0x8] sm:$0xff]
        %v483 = vld [vmem:[#allocation8 + $0x10] sm:$0xff]
        %v484 = vld [vmem:[#allocation8 + $0x18] sm:$0xff]
        %v485 = vld [vmem:[#allocation8 + $0x20] sm:$0xff]
        %v486 = vld [vmem:[#allocation8 + $0x28] sm:$0xff]
        %v487 = vld [vmem:[#allocation8 + $0x30] sm:$0xff]
        %v488 = vld [vmem:[#allocation8 + $0x38] sm:$0xff]
        %v489 = vld [vmem:[#allocation8 + $0x40] sm:$0xff]
        %v490 = vld [vmem:[#allocation8 + $0x48] sm:$0xff]
        %v491 = vld [vmem:[#allocation8 + $0x50] sm:$0xff]
        %v492 = vld [vmem:[#allocation8 + $0x58] sm:$0xff]
        %v493 = vld [vmem:[#allocation8 + $0x60] sm:$0xff]
        %v494 = vld [vmem:[#allocation8 + $0x68] sm:$0xff]
        %v495 = vld [vmem:[#allocation8 + $0x70] sm:$0xff]
        %v496 = vld [vmem:[#allocation8 + $0x78] sm:$0xff]
        %v497 = vld [vmem:[#allocation8 + $0x80] sm:$0xff]
        %v498 = vld [vmem:[#allocation8 + $0x88] sm:$0xff]
        %v499 = vld [vmem:[#allocation8 + $0x90] sm:$0xff]
        %v500 = vld [vmem:[#allocation8 + $0x98] sm:$0xff]
        %v501 = vld [vmem:[#allocation8 + $0xa0] sm:$0xff]
        %v502 = vld [vmem:[#allocation8 + $0xa8] sm:$0xff]
        %v503 = vld [vmem:[#allocation8 + $0xb0] sm:$0xff]
        %v504 = vld [vmem:[#allocation8 + $0xb8] sm:$0xff]
        %v505 = vld [vmem:[#allocation8 + $0xc0] sm:$0xff]
        %v506 = vld [vmem:[#allocation8 + $0xc8] sm:$0xff]
        %v507 = vld [vmem:[#allocation8 + $0xd0] sm:$0xff]
        %v508 = vld [vmem:[#allocation8 + $0xd8] sm:$0xff]
        %v509 = vld [vmem:[#allocation8 + $0xe0] sm:$0xff]
        %v510 = vld [vmem:[#allocation8 + $0xe8] sm:$0xff]
        %v511 = vld [vmem:[#allocation8 + $0xf0] sm:$0xff]
        %v512 = vld [vmem:[#allocation8 + $0xf8] sm:$0xff]
        %v513 = vld [vmem:[#allocation10] sm:$0x3]
        %v514 = vld [vmem:[#allocation11] sm:$0xff]
        %v515 = vld [vmem:[#allocation11 + $0x8] sm:$0xff]
        %v516 = vld [vmem:[#allocation11 + $0x10] sm:$0xff]
        %v517 = vld [vmem:[#allocation11 + $0x18] sm:$0xff]
        %v518 = vld [vmem:[#allocation11 + $0x20] sm:$0xff]
        %v519 = vld [vmem:[#allocation11 + $0x28] sm:$0xff]
        %v520 = vld [vmem:[#allocation11 + $0x30] sm:$0xff]
        %v521 = vld [vmem:[#allocation11 + $0x38] sm:$0xff]
        %v522 = vld [vmem:[#allocation11 + $0x40] sm:$0xff]
        %v523 = vld [vmem:[#allocation11 + $0x48] sm:$0xff]
        %v524 = vld [vmem:[#allocation11 + $0x50] sm:$0xff]
        %v525 = vld [vmem:[#allocation11 + $0x58] sm:$0xff]
        %v526 = vld [vmem:[#allocation11 + $0x60] sm:$0xff]
        %v527 = vld [vmem:[#allocation11 + $0x68] sm:$0xff]
        %v528 = vld [vmem:[#allocation11 + $0x70] sm:$0xff]
        %v529 = vld [vmem:[#allocation11 + $0x78] sm:$0xff]
        %v530 = vld [vmem:[#allocation11 + $0x80] sm:$0xff]
        %v531 = vld [vmem:[#allocation11 + $0x88] sm:$0xff]
        %v532 = vld [vmem:[#allocation11 + $0x90] sm:$0xff]
        %v533 = vld [vmem:[#allocation11 + $0x98] sm:$0xff]
        %v534 = vld [vmem:[#allocation11 + $0xa0] sm:$0xff]
        %v535 = vld [vmem:[#allocation11 + $0xa8] sm:$0xff]
        %v536 = vld [vmem:[#allocation11 + $0xb0] sm:$0xff]
        %v537 = vld [vmem:[#allocation11 + $0xb8] sm:$0xff]
        %v538 = vld [vmem:[#allocation11 + $0xc0] sm:$0xff]
        %v539 = vld [vmem:[#allocation11 + $0xc8] sm:$0xff]
        %v540 = vld [vmem:[#allocation11 + $0xd0] sm:$0xff]
        %v541 = vld [vmem:[#allocation11 + $0xd8] sm:$0xff]
        %v542 = vld [vmem:[#allocation11 + $0xe0] sm:$0xff]
        %v543 = vld [vmem:[#allocation11 + $0xe8] sm:$0xff]
        %v544 = vld [vmem:[#allocation11 + $0xf0] sm:$0xff]
        %v545 = vld [vmem:[#allocation11 + $0xf8] sm:$0xff]
        %v546 = vld [vmem:[#allocation11 + $0x100] sm:$0xff]
        %v547 = vld [vmem:[#allocation11 + $0x108] sm:$0xff]
        %v548 = vld [vmem:[#allocation11 + $0x110] sm:$0xff]
        %v549 = vld [vmem:[#allocation11 + $0x118] sm:$0xff]
        %v550 = vld [vmem:[#allocation11 + $0x120] sm:$0xff]
        %v551 = vld [vmem:[#allocation11 + $0x128] sm:$0xff]
        %v552 = vld [vmem:[#allocation11 + $0x130] sm:$0xff]
        %v553 = vld [vmem:[#allocation11 + $0x138] sm:$0xff]
        %v554 = vld [vmem:[#allocation11 + $0x140] sm:$0xff]
        %v555 = vld [vmem:[#allocation11 + $0x148] sm:$0xff]
        %v556 = vld [vmem:[#allocation11 + $0x150] sm:$0xff]
        %v557 = vld [vmem:[#allocation11 + $0x158] sm:$0xff]
        %v558 = vld [vmem:[#allocation11 + $0x160] sm:$0xff]
        %v559 = vld [vmem:[#allocation11 + $0x168] sm:$0xff]
        %v560 = vld [vmem:[#allocation11 + $0x170] sm:$0xff]
        %v561 = vld [vmem:[#allocation11 + $0x178] sm:$0xff]
        %v562 = vld [vmem:[#allocation11 + $0x180] sm:$0xff]
        %v563 = vld [vmem:[#allocation11 + $0x188] sm:$0xff]
        %v564 = vld [vmem:[#allocation11 + $0x190] sm:$0xff]
        %v565 = vld [vmem:[#allocation11 + $0x198] sm:$0xff]
        %v566 = vld [vmem:[#allocation11 + $0x1a0] sm:$0xff]
        %v567 = vld [vmem:[#allocation11 + $0x1a8] sm:$0xff]
        %v568 = vld [vmem:[#allocation11 + $0x1b0] sm:$0xff]
        %v569 = vld [vmem:[#allocation11 + $0x1b8] sm:$0xff]
        %v570 = vld [vmem:[#allocation11 + $0x1c0] sm:$0xff]
        %v571 = vld [vmem:[#allocation11 + $0x1c8] sm:$0xff]
        %v572 = vld [vmem:[#allocation11 + $0x1d0] sm:$0xff]
        %v573 = vld [vmem:[#allocation11 + $0x1d8] sm:$0xff]
        %v574 = vld [vmem:[#allocation11 + $0x1e0] sm:$0xff]
        %v575 = vld [vmem:[#allocation11 + $0x1e8] sm:$0xff]
        %v576 = vld [vmem:[#allocation11 + $0x1f0] sm:$0xff]
        %v577 = vld [vmem:[#allocation11 + $0x1f8] sm:$0xff]
        %v578 = vld [vmem:[%s7] sm:$0xf]
        %v579 = vld [vmem:[#allocation13] sm:$0xff]
        %v580 = vld [vmem:[#allocation13 + $0x8] sm:$0xff]
        %v581 = vld [vmem:[#allocation13 + $0x10] sm:$0xff]
        %v582 = vld [vmem:[#allocation13 + $0x18] sm:$0xff]
        %v583 = vld [vmem:[#allocation13 + $0x20] sm:$0xff]
        %v584 = vld [vmem:[#allocation13 + $0x28] sm:$0xff]
        %v585 = vld [vmem:[#allocation13 + $0x30] sm:$0xff]
        %v586 = vld [vmem:[#allocation13 + $0x38] sm:$0xff]
        %v587 = vld [vmem:[#allocation13 + $0x40] sm:$0xff]
        %v588 = vld [vmem:[#allocation13 + $0x48] sm:$0xff]
        %v589 = vld [vmem:[#allocation13 + $0x50] sm:$0xff]
        %v590 = vld [vmem:[#allocation13 + $0x58] sm:$0xff]
        %v591 = vld [vmem:[#allocation13 + $0x60] sm:$0xff]
        %v592 = vld [vmem:[#allocation13 + $0x68] sm:$0xff]
        %v593 = vld [vmem:[#allocation13 + $0x70] sm:$0xff]
        %v594 = vld [vmem:[#allocation13 + $0x78] sm:$0xff]
        %v595 = vld [vmem:[#allocation13 + $0x80] sm:$0xff]
        %v596 = vld [vmem:[#allocation13 + $0x88] sm:$0xff]
        %v597 = vld [vmem:[#allocation13 + $0x90] sm:$0xff]
        %v598 = vld [vmem:[#allocation13 + $0x98] sm:$0xff]
        %v599 = vld [vmem:[#allocation13 + $0xa0] sm:$0xff]
        %v600 = vld [vmem:[#allocation13 + $0xa8] sm:$0xff]
        %v601 = vld [vmem:[#allocation13 + $0xb0] sm:$0xff]
        %v602 = vld [vmem:[#allocation13 + $0xb8] sm:$0xff]
        %v603 = vld [vmem:[#allocation13 + $0xc0] sm:$0xff]
        %v604 = vld [vmem:[#allocation13 + $0xc8] sm:$0xff]
        %v605 = vld [vmem:[#allocation13 + $0xd0] sm:$0xff]
        %v606 = vld [vmem:[#allocation13 + $0xd8] sm:$0xff]
        %v607 = vld [vmem:[#allocation13 + $0xe0] sm:$0xff]
        %v608 = vld [vmem:[#allocation13 + $0xe8] sm:$0xff]
        %v609 = vld [vmem:[#allocation13 + $0xf0] sm:$0xff]
        %v610 = vld [vmem:[#allocation13 + $0xf8] sm:$0xff]
        %v611 = vld [vmem:[%s9] sm:$0x3]
        %v612 = vld [vmem:[#allocation5] sm:$0xff]
        %v613 = vld [vmem:[#allocation5 + $0x8] sm:$0xff]
        %v614 = vld [vmem:[#allocation5 + $0x10] sm:$0xff]
        %v615 = vld [vmem:[#allocation5 + $0x18] sm:$0xff]
        %v616 = vld [vmem:[%s408] sm:$0xff]
        %v617 = vld [vmem:[%s408 + $0x8] sm:$0xff]
        %v618 = vld [vmem:[%s408 + $0x10] sm:$0xff]
        %v619 = vld [vmem:[%s408 + $0x18] sm:$0xff]
        %v620 = vld [vmem:[%s408 + $0x20] sm:$0xff]
        %v621 = vld [vmem:[%s408 + $0x28] sm:$0xff]
        %v622 = vld [vmem:[%s408 + $0x30] sm:$0xff]
        %v623 = vld [vmem:[%s408 + $0x38] sm:$0xff]
        %v624 = vadd.f32 %v612, %v613
        %625 = vadd.xlane.f32.xlu0 %v624
        %v626 = vpop.xlane.xlu0 %625
        %v627 = vadd.f32 %v614, %v615
        %628 = vadd.xlane.f32.xlu0 %v627
        %v629 = vpop.xlane.xlu0 %628
        %v630 = vrcp.pop 256.0
        %v631 = vmul.f32 256.0, %v630
        %v632 = vsub.f32 1.0, %v631
        %v633 = vmul.f32 %v630, %v632
        %v634 = vadd.f32 %v630, %v633
        %vm635 = vweird.f32 %v630
        %v636 = vsel %vm635, %v630, %v634
        %v637 = vmul.f32 %v626, %v636
        %v638 = vmul.f32 %v629, %v636
        %v639 = vsub.f32 %v612, %v637
        %v640 = vsub.f32 %v613, %v637
        %v641 = vsub.f32 %v614, %v638
        %v642 = vsub.f32 %v615, %v638
        %v643 = vmul.f32 %v639, %v639
        %v644 = vmul.f32 %v640, %v640
        %v645 = vmul.f32 %v641, %v641
        %v646 = vmul.f32 %v642, %v642
        %v647 = vadd.f32 %v643, %v644
        %648 = vadd.xlane.f32.xlu0 %v647
        %v649 = vpop.xlane.xlu0 %648
        %v650 = vadd.f32 %v645, %v646
        %651 = vadd.xlane.f32.xlu0 %v650
        %v652 = vpop.xlane.xlu0 %651
        %v653 = vmul.f32 %v649, %v636
        %v654 = vmul.f32 %v652, %v636
        %v655 = vadd.f32 %v653, 1e-05
        %v656 = vadd.f32 %v654, 1e-05
        %v657 = vrsqrt.pop %v655
        %v658 = vmul.f32 %v657, %v655
        %v659 = vmul.f32 %v658, %v657
        %v660 = vmul.f32 0.5, %v659
        %v661 = vsub.f32 1.5, %v660
        %v662 = vmul.f32 %v657, %v661
        %vm663 = vweird.f32 %v655
        %vm664 = vweird.f32 %v657
        %vm665 = vmor %vm663, %vm664
        %v666 = vsel %vm665, %v657, %v662
        %v667 = vrsqrt.pop %v656
        %v668 = vmul.f32 %v667, %v656
        %v669 = vmul.f32 %v668, %v667
        %v670 = vmul.f32 0.5, %v669
        %v671 = vsub.f32 1.5, %v670
        %v672 = vmul.f32 %v667, %v671
        %vm673 = vweird.f32 %v656
        %vm674 = vweird.f32 %v667
        %vm675 = vmor %vm673, %vm674
        %v676 = vsel %vm675, %v667, %v672
        %v677 = vmul.f32 %v639, %v666
        %v678 = vmul.f32 %v640, %v666
        %v679 = vmul.f32 %v641, %v676
        %v680 = vmul.f32 %v642, %v676
        %v682 = vperm.slane %v479, 0
        %v683 = vperm.slane %v479, 1
        %v686 = vmul.f32 %v677, %v682
        %v687 = vmul.f32 %v678, %v683
        %v688 = vmul.f32 %v679, %v682
        %v689 = vmul.f32 %v680, %v683
        %v691 = vperm.slane %v480, 0
        %v692 = vperm.slane %v480, 1
        %v695 = vadd.f32 %v686, %v691
        %v696 = vadd.f32 %v687, %v692
        %v697 = vadd.f32 %v688, %v691
        %v698 = vadd.f32 %v689, %v692
        %v699 = vpack.c.bf16 %v697, %v695
        %v700 = vpack.c.bf16 %v698, %v696
        %v701 = vadd.f32 %v616, %v617
        %702 = vadd.xlane.f32.xlu0 %v701
        %v703 = vpop.xlane.xlu0 %702
        %v704 = vadd.f32 %v618, %v619
        %705 = vadd.xlane.f32.xlu0 %v704
        %v706 = vpop.xlane.xlu0 %705
        %v707 = vadd.f32 %v620, %v621
        %708 = vadd.xlane.f32.xlu0 %v707
        %v709 = vpop.xlane.xlu0 %708
        %v710 = vadd.f32 %v622, %v623
        %711 = vadd.xlane.f32.xlu0 %v710
        %v712 = vpop.xlane.xlu0 %711
        %v713 = vmul.f32 %v703, %v636
        %v714 = vmul.f32 %v706, %v636
        %v715 = vmul.f32 %v709, %v636
        %v716 = vmul.f32 %v712, %v636
        %v717 = vsub.f32 %v616, %v713
        %v718 = vsub.f32 %v617, %v713
        %v719 = vsub.f32 %v618, %v714
        %v720 = vsub.f32 %v619, %v714
        %v721 = vsub.f32 %v620, %v715
        %v722 = vsub.f32 %v621, %v715
        %v723 = vsub.f32 %v622, %v716
        %v724 = vsub.f32 %v623, %v716
        %v725 = vmul.f32 %v717, %v717
        %v726 = vmul.f32 %v718, %v718
        %v727 = vmul.f32 %v719, %v719
        %v728 = vmul.f32 %v720, %v720
        %v729 = vmul.f32 %v721, %v721
        %v730 = vmul.f32 %v722, %v722
        %v731 = vmul.f32 %v723, %v723
        %v732 = vmul.f32 %v724, %v724
        %v733 = vadd.f32 %v725, %v726
        %734 = vadd.xlane.f32.xlu0 %v733
        %v735 = vpop.xlane.xlu0 %734
        %v736 = vadd.f32 %v727, %v728
        %737 = vadd.xlane.f32.xlu0 %v736
        %v738 = vpop.xlane.xlu0 %737
        %v739 = vadd.f32 %v729, %v730
        %740 = vadd.xlane.f32.xlu0 %v739
        %v741 = vpop.xlane.xlu0 %740
        %v742 = vadd.f32 %v731, %v732
        %743 = vadd.xlane.f32.xlu0 %v742
        %v744 = vpop.xlane.xlu0 %743
        %v745 = vmul.f32 %v735, %v636
        %v746 = vmul.f32 %v738, %v636
        %v747 = vmul.f32 %v741, %v636
        %v748 = vmul.f32 %v744, %v636
        %v749 = vadd.f32 %v745, 1e-05
        %v750 = vadd.f32 %v746, 1e-05
        %v751 = vadd.f32 %v747, 1e-05
        %v752 = vadd.f32 %v748, 1e-05
        %v753 = vrsqrt.pop %v749
        %v754 = vmul.f32 %v753, %v749
        %v755 = vmul.f32 %v754, %v753
        %v756 = vmul.f32 0.5, %v755
        %v757 = vsub.f32 1.5, %v756
        %v758 = vmul.f32 %v753, %v757
        %vm759 = vweird.f32 %v749
        %vm760 = vweird.f32 %v753
        %vm761 = vmor %vm759, %vm760
        %v762 = vsel %vm761, %v753, %v758
        %v763 = vrsqrt.pop %v750
        %v764 = vmul.f32 %v763, %v750
        %v765 = vmul.f32 %v764, %v763
        %v766 = vmul.f32 0.5, %v765
        %v767 = vsub.f32 1.5, %v766
        %v768 = vmul.f32 %v763, %v767
        %vm769 = vweird.f32 %v750
        %vm770 = vweird.f32 %v763
        %vm771 = vmor %vm769, %vm770
        %v772 = vsel %vm771, %v763, %v768
        %v773 = vrsqrt.pop %v751
        %v774 = vmul.f32 %v773, %v751
        %v775 = vmul.f32 %v774, %v773
        %v776 = vmul.f32 0.5, %v775
        %v777 = vsub.f32 1.5, %v776
        %v778 = vmul.f32 %v773, %v777
        %vm779 = vweird.f32 %v751
        %vm780 = vweird.f32 %v773
        %vm781 = vmor %vm779, %vm780
        %v782 = vsel %vm781, %v773, %v778
        %v783 = vrsqrt.pop %v752
        %v784 = vmul.f32 %v783, %v752
        %v785 = vmul.f32 %v784, %v783
        %v786 = vmul.f32 0.5, %v785
        %v787 = vsub.f32 1.5, %v786
        %v788 = vmul.f32 %v783, %v787
        %vm789 = vweird.f32 %v752
        %vm790 = vweird.f32 %v783
        %vm791 = vmor %vm789, %vm790
        %v792 = vsel %vm791, %v783, %v788
        %v793 = vmul.f32 %v717, %v762
        %v794 = vmul.f32 %v718, %v762
        %v795 = vmul.f32 %v719, %v772
        %v796 = vmul.f32 %v720, %v772
        %v797 = vmul.f32 %v721, %v782
        %v798 = vmul.f32 %v722, %v782
        %v799 = vmul.f32 %v723, %v792
        %v800 = vmul.f32 %v724, %v792
        %v801 = vmul.f32 %v793, %v682
        %v802 = vmul.f32 %v794, %v683
        %v803 = vmul.f32 %v795, %v682
        %v804 = vmul.f32 %v796, %v683
        %v805 = vmul.f32 %v797, %v682
        %v806 = vmul.f32 %v798, %v683
        %v807 = vmul.f32 %v799, %v682
        %v808 = vmul.f32 %v800, %v683
        %v809 = vadd.f32 %v801, %v691
        %v810 = vadd.f32 %v802, %v692
        %v811 = vadd.f32 %v803, %v691
        %v812 = vadd.f32 %v804, %v692
        %v813 = vadd.f32 %v805, %v691
        %v814 = vadd.f32 %v806, %v692
        %v815 = vadd.f32 %v807, %v691
        %v816 = vadd.f32 %v808, %v692
        %v817 = vpack.c.bf16 %v811, %v809
        %v818 = vpack.c.bf16 %v812, %v810
        %v819 = vpack.c.bf16 %v815, %v813
        %v820 = vpack.c.bf16 %v816, %v814
        %v822 = vperm.slane %v513, 0
        %v823 = vperm.slane %v513, 1
        %v858 = vunpack.c.l.b16 %v481
        %v859 = vunpack.c.h.b16 %v481
        %v860 = vunpack.c.l.b16 %v482
        %v861 = vunpack.c.h.b16 %v482
        %v862 = vunpack.c.l.b16 %v483
        %v863 = vunpack.c.h.b16 %v483
        %v864 = vunpack.c.l.b16 %v484
        %v865 = vunpack.c.h.b16 %v484
        %v866 = vunpack.c.l.b16 %v485
        %v867 = vunpack.c.h.b16 %v485
        %v868 = vunpack.c.l.b16 %v486
        %v869 = vunpack.c.h.b16 %v486
        %v870 = vunpack.c.l.b16 %v487
        %v871 = vunpack.c.h.b16 %v487
        %v872 = vunpack.c.l.b16 %v488
        %v873 = vunpack.c.h.b16 %v488
        %v874 = vunpack.c.l.b16 %v489
        %v875 = vunpack.c.h.b16 %v489
        %v876 = vunpack.c.l.b16 %v490
        %v877 = vunpack.c.h.b16 %v490
        %v878 = vunpack.c.l.b16 %v491
        %v879 = vunpack.c.h.b16 %v491
        %v880 = vunpack.c.l.b16 %v492
        %v881 = vunpack.c.h.b16 %v492
        %v882 = vunpack.c.l.b16 %v493
        %v883 = vunpack.c.h.b16 %v493
        %v884 = vunpack.c.l.b16 %v494
        %v885 = vunpack.c.h.b16 %v494
        %v886 = vunpack.c.l.b16 %v495
        %v887 = vunpack.c.h.b16 %v495
        %v888 = vunpack.c.l.b16 %v496
        %v889 = vunpack.c.h.b16 %v496
        %v890 = vunpack.c.l.b16 %v497
        %v891 = vunpack.c.h.b16 %v497
        %v892 = vunpack.c.l.b16 %v498
        %v893 = vunpack.c.h.b16 %v498
        %v894 = vunpack.c.l.b16 %v499
        %v895 = vunpack.c.h.b16 %v499
        %v896 = vunpack.c.l.b16 %v500
        %v897 = vunpack.c.h.b16 %v500
        %v898 = vunpack.c.l.b16 %v501
        %v899 = vunpack.c.h.b16 %v501
        %v900 = vunpack.c.l.b16 %v502
        %v901 = vunpack.c.h.b16 %v502
        %v902 = vunpack.c.l.b16 %v503
        %v903 = vunpack.c.h.b16 %v503
        %v904 = vunpack.c.l.b16 %v504
        %v905 = vunpack.c.h.b16 %v504
        %v906 = vunpack.c.l.b16 %v505
        %v907 = vunpack.c.h.b16 %v505
        %v908 = vunpack.c.l.b16 %v506
        %v909 = vunpack.c.h.b16 %v506
        %v910 = vunpack.c.l.b16 %v507
        %v911 = vunpack.c.h.b16 %v507
        %v912 = vunpack.c.l.b16 %v508
        %v913 = vunpack.c.h.b16 %v508
        %v914 = vunpack.c.l.b16 %v509
        %v915 = vunpack.c.h.b16 %v509
        %v916 = vunpack.c.l.b16 %v510
        %v917 = vunpack.c.h.b16 %v510
        %v918 = vunpack.c.l.b16 %v511
        %v919 = vunpack.c.h.b16 %v511
        %v920 = vunpack.c.l.b16 %v512
        %v921 = vunpack.c.h.b16 %v512
        %v922 = vpack.c.b16 %v860, %v858
        %v923 = vpack.c.b16 %v861, %v859
        %v924 = vpack.c.b16 %v864, %v862
        %v925 = vpack.c.b16 %v865, %v863
        %v926 = vpack.c.b16 %v868, %v866
        %v927 = vpack.c.b16 %v869, %v867
        %v928 = vpack.c.b16 %v872, %v870
        %v929 = vpack.c.b16 %v873, %v871
        %v930 = vpack.c.b16 %v876, %v874
        %v931 = vpack.c.b16 %v877, %v875
        %v932 = vpack.c.b16 %v880, %v878
        %v933 = vpack.c.b16 %v881, %v879
        %v934 = vpack.c.b16 %v884, %v882
        %v935 = vpack.c.b16 %v885, %v883
        %v936 = vpack.c.b16 %v888, %v886
        %v937 = vpack.c.b16 %v889, %v887
        %v938 = vpack.c.b16 %v892, %v890
        %v939 = vpack.c.b16 %v893, %v891
        %v940 = vpack.c.b16 %v896, %v894
        %v941 = vpack.c.b16 %v897, %v895
        %v942 = vpack.c.b16 %v900, %v898
        %v943 = vpack.c.b16 %v901, %v899
        %v944 = vpack.c.b16 %v904, %v902
        %v945 = vpack.c.b16 %v905, %v903
        %v946 = vpack.c.b16 %v908, %v906
        %v947 = vpack.c.b16 %v909, %v907
        %v948 = vpack.c.b16 %v912, %v910
        %v949 = vpack.c.b16 %v913, %v911
        %v950 = vpack.c.b16 %v916, %v914
        %v951 = vpack.c.b16 %v917, %v915
        %v952 = vpack.c.b16 %v920, %v918
        %v953 = vpack.c.b16 %v921, %v919
        %986 = vmatpush.bf16.msra.mxu0 %v936
        %987 = vmatpush.bf16.msra.mxu0 %v934
        %988 = vmatpush.bf16.msra.mxu0 %v932
        %989 = vmatpush.bf16.msra.mxu0 %v930
        %990 = vmatpush.bf16.msra.mxu0 %v928
        %991 = vmatpush.bf16.msra.mxu0 %v926
        %992 = vmatpush.bf16.msra.mxu0 %v924
        %993 = vmatpush.bf16.msra.mxu0 %v922
        %994 = vmatmul.bf16.gmra.mxu0 %v699
        %v995 = vpop.f32.mrf.mxu0
        %v996 = vadd.f32 %v822, %v995
        %v997 = vpop.f32.mrf.mxu0
        %v998 = vadd.f32 %v822, %v997
        %999 = vdwg.mxu0
        %1000 = vmatpush.bf16.msra.mxu0 %v952
        %1001 = vmatpush.bf16.msra.mxu0 %v950
        %1002 = vmatpush.bf16.msra.mxu0 %v948
        %1003 = vmatpush.bf16.msra.mxu0 %v946
        %1004 = vmatpush.bf16.msra.mxu0 %v944
        %1005 = vmatpush.bf16.msra.mxu0 %v942
        %1006 = vmatpush.bf16.msra.mxu0 %v940
        %1007 = vmatpush.bf16.msra.mxu0 %v938
        %1008 = vmatmul.bf16.gmra.mxu0 %v700
        %v1009 = vpop.f32.mrf.mxu0
        %v1010 = vadd.f32 %v996, %v1009
        %v1011 = vpop.f32.mrf.mxu0
        %v1012 = vadd.f32 %v998, %v1011
        %1013 = vdwg.mxu0
        %1014 = vmatpush.bf16.msra.mxu0 %v937
        %1015 = vmatpush.bf16.msra.mxu0 %v935
        %1016 = vmatpush.bf16.msra.mxu0 %v933
        %1017 = vmatpush.bf16.msra.mxu0 %v931
        %1018 = vmatpush.bf16.msra.mxu0 %v929
        %1019 = vmatpush.bf16.msra.mxu0 %v927
        %1020 = vmatpush.bf16.msra.mxu0 %v925
        %1021 = vmatpush.bf16.msra.mxu0 %v923
        %1022 = vmatmul.bf16.gmra.mxu0 %v699
        %v1023 = vpop.f32.mrf.mxu0
        %v1024 = vadd.f32 %v823, %v1023
        %v1025 = vpop.f32.mrf.mxu0
        %v1026 = vadd.f32 %v823, %v1025
        %1027 = vdwg.mxu0
        %1028 = vmatpush.bf16.msra.mxu0 %v953
        %1029 = vmatpush.bf16.msra.mxu0 %v951
        %1030 = vmatpush.bf16.msra.mxu0 %v949
        %1031 = vmatpush.bf16.msra.mxu0 %v947
        %1032 = vmatpush.bf16.msra.mxu0 %v945
        %1033 = vmatpush.bf16.msra.mxu0 %v943
        %1034 = vmatpush.bf16.msra.mxu0 %v941
        %1035 = vmatpush.bf16.msra.mxu0 %v939
        %1036 = vmatmul.bf16.gmra.mxu0 %v700
        %v1037 = vpop.f32.mrf.mxu0
        %v1038 = vadd.f32 %v1024, %v1037
        %v1039 = vpop.f32.mrf.mxu0
        %v1040 = vadd.f32 %v1026, %v1039
        %1041 = vdwg.mxu0
        %v1042 = vmul.f32 %v1010, 0.088388346
        %v1043 = vmul.f32 %v1038, 0.088388346
        %v1044 = vmul.f32 %v1012, 0.088388346
        %v1045 = vmul.f32 %v1040, 0.088388346
        %v1047 = vperm.slane %v578, 0
        %v1048 = vperm.slane %v578, 1
        %v1049 = vperm.slane %v578, 2
        %v1050 = vperm.slane %v578, 3
        %v1119 = vunpack.c.l.b16 %v514
        %v1120 = vunpack.c.h.b16 %v514
        %v1121 = vunpack.c.l.b16 %v515
        %v1122 = vunpack.c.h.b16 %v515
        %v1123 = vunpack.c.l.b16 %v516
        %v1124 = vunpack.c.h.b16 %v516
        %v1125 = vunpack.c.l.b16 %v517
        %v1126 = vunpack.c.h.b16 %v517
        %v1127 = vunpack.c.l.b16 %v518
        %v1128 = vunpack.c.h.b16 %v518
        %v1129 = vunpack.c.l.b16 %v519
        %v1130 = vunpack.c.h.b16 %v519
        %v1131 = vunpack.c.l.b16 %v520
        %v1132 = vunpack.c.h.b16 %v520
        %v1133 = vunpack.c.l.b16 %v521
        %v1134 = vunpack.c.h.b16 %v521
        %v1135 = vunpack.c.l.b16 %v522
        %v1136 = vunpack.c.h.b16 %v522
        %v1137 = vunpack.c.l.b16 %v523
        %v1138 = vunpack.c.h.b16 %v523
        %v1139 = vunpack.c.l.b16 %v524
        %v1140 = vunpack.c.h.b16 %v524
        %v1141 = vunpack.c.l.b16 %v525
        %v1142 = vunpack.c.h.b16 %v525
        %v1143 = vunpack.c.l.b16 %v526
        %v1144 = vunpack.c.h.b16 %v526
        %v1145 = vunpack.c.l.b16 %v527
        %v1146 = vunpack.c.h.b16 %v527
        %v1147 = vunpack.c.l.b16 %v528
        %v1148 = vunpack.c.h.b16 %v528
        %v1149 = vunpack.c.l.b16 %v529
        %v1150 = vunpack.c.h.b16 %v529
        %v1151 = vunpack.c.l.b16 %v530
        %v1152 = vunpack.c.h.b16 %v530
        %v1153 = vunpack.c.l.b16 %v531
        %v1154 = vunpack.c.h.b16 %v531
        %v1155 = vunpack.c.l.b16 %v532
        %v1156 = vunpack.c.h.b16 %v532
        %v1157 = vunpack.c.l.b16 %v533
        %v1158 = vunpack.c.h.b16 %v533
        %v1159 = vunpack.c.l.b16 %v534
        %v1160 = vunpack.c.h.b16 %v534
        %v1161 = vunpack.c.l.b16 %v535
        %v1162 = vunpack.c.h.b16 %v535
        %v1163 = vunpack.c.l.b16 %v536
        %v1164 = vunpack.c.h.b16 %v536
        %v1165 = vunpack.c.l.b16 %v537
        %v1166 = vunpack.c.h.b16 %v537
        %v1167 = vunpack.c.l.b16 %v538
        %v1168 = vunpack.c.h.b16 %v538
        %v1169 = vunpack.c.l.b16 %v539
        %v1170 = vunpack.c.h.b16 %v539
        %v1171 = vunpack.c.l.b16 %v540
        %v1172 = vunpack.c.h.b16 %v540
        %v1173 = vunpack.c.l.b16 %v541
        %v1174 = vunpack.c.h.b16 %v541
        %v1175 = vunpack.c.l.b16 %v542
        %v1176 = vunpack.c.h.b16 %v542
        %v1177 = vunpack.c.l.b16 %v543
        %v1178 = vunpack.c.h.b16 %v543
        %v1179 = vunpack.c.l.b16 %v544
        %v1180 = vunpack.c.h.b16 %v544
        %v1181 = vunpack.c.l.b16 %v545
        %v1182 = vunpack.c.h.b16 %v545
        %v1183 = vunpack.c.l.b16 %v546
        %v1184 = vunpack.c.h.b16 %v546
        %v1185 = vunpack.c.l.b16 %v547
        %v1186 = vunpack.c.h.b16 %v547
        %v1187 = vunpack.c.l.b16 %v548
        %v1188 = vunpack.c.h.b16 %v548
        %v1189 = vunpack.c.l.b16 %v549
        %v1190 = vunpack.c.h.b16 %v549
        %v1191 = vunpack.c.l.b16 %v550
        %v1192 = vunpack.c.h.b16 %v550
        %v1193 = vunpack.c.l.b16 %v551
        %v1194 = vunpack.c.h.b16 %v551
        %v1195 = vunpack.c.l.b16 %v552
        %v1196 = vunpack.c.h.b16 %v552
        %v1197 = vunpack.c.l.b16 %v553
        %v1198 = vunpack.c.h.b16 %v553
        %v1199 = vunpack.c.l.b16 %v554
        %v1200 = vunpack.c.h.b16 %v554
        %v1201 = vunpack.c.l.b16 %v555
        %v1202 = vunpack.c.h.b16 %v555
        %v1203 = vunpack.c.l.b16 %v556
        %v1204 = vunpack.c.h.b16 %v556
        %v1205 = vunpack.c.l.b16 %v557
        %v1206 = vunpack.c.h.b16 %v557
        %v1207 = vunpack.c.l.b16 %v558
        %v1208 = vunpack.c.h.b16 %v558
        %v1209 = vunpack.c.l.b16 %v559
        %v1210 = vunpack.c.h.b16 %v559
        %v1211 = vunpack.c.l.b16 %v560
        %v1212 = vunpack.c.h.b16 %v560
        %v1213 = vunpack.c.l.b16 %v561
        %v1214 = vunpack.c.h.b16 %v561
        %v1215 = vunpack.c.l.b16 %v562
        %v1216 = vunpack.c.h.b16 %v562
        %v1217 = vunpack.c.l.b16 %v563
        %v1218 = vunpack.c.h.b16 %v563
        %v1219 = vunpack.c.l.b16 %v564
        %v1220 = vunpack.c.h.b16 %v564
        %v1221 = vunpack.c.l.b16 %v565
        %v1222 = vunpack.c.h.b16 %v565
        %v1223 = vunpack.c.l.b16 %v566
        %v1224 = vunpack.c.h.b16 %v566
        %v1225 = vunpack.c.l.b16 %v567
        %v1226 = vunpack.c.h.b16 %v567
        %v1227 = vunpack.c.l.b16 %v568
        %v1228 = vunpack.c.h.b16 %v568
        %v1229 = vunpack.c.l.b16 %v569
        %v1230 = vunpack.c.h.b16 %v569
        %v1231 = vunpack.c.l.b16 %v570
        %v1232 = vunpack.c.h.b16 %v570
        %v1233 = vunpack.c.l.b16 %v571
        %v1234 = vunpack.c.h.b16 %v571
        %v1235 = vunpack.c.l.b16 %v572
        %v1236 = vunpack.c.h.b16 %v572
        %v1237 = vunpack.c.l.b16 %v573
        %v1238 = vunpack.c.h.b16 %v573
        %v1239 = vunpack.c.l.b16 %v574
        %v1240 = vunpack.c.h.b16 %v574
        %v1241 = vunpack.c.l.b16 %v575
        %v1242 = vunpack.c.h.b16 %v575
        %v1243 = vunpack.c.l.b16 %v576
        %v1244 = vunpack.c.h.b16 %v576
        %v1245 = vunpack.c.l.b16 %v577
        %v1246 = vunpack.c.h.b16 %v577
        %v1247 = vpack.c.b16 %v1123, %v1119
        %v1248 = vpack.c.b16 %v1124, %v1120
        %v1249 = vpack.c.b16 %v1125, %v1121
        %v1250 = vpack.c.b16 %v1126, %v1122
        %v1251 = vpack.c.b16 %v1131, %v1127
        %v1252 = vpack.c.b16 %v1132, %v1128
        %v1253 = vpack.c.b16 %v1133, %v1129
        %v1254 = vpack.c.b16 %v1134, %v1130
        %v1255 = vpack.c.b16 %v1139, %v1135
        %v1256 = vpack.c.b16 %v1140, %v1136
        %v1257 = vpack.c.b16 %v1141, %v1137
        %v1258 = vpack.c.b16 %v1142, %v1138
        %v1259 = vpack.c.b16 %v1147, %v1143
        %v1260 = vpack.c.b16 %v1148, %v1144
        %v1261 = vpack.c.b16 %v1149, %v1145
        %v1262 = vpack.c.b16 %v1150, %v1146
        %v1263 = vpack.c.b16 %v1155, %v1151
        %v1264 = vpack.c.b16 %v1156, %v1152
        %v1265 = vpack.c.b16 %v1157, %v1153
        %v1266 = vpack.c.b16 %v1158, %v1154
        %v1267 = vpack.c.b16 %v1163, %v1159
        %v1268 = vpack.c.b16 %v1164, %v1160
        %v1269 = vpack.c.b16 %v1165, %v1161
        %v1270 = vpack.c.b16 %v1166, %v1162
        %v1271 = vpack.c.b16 %v1171, %v1167
        %v1272 = vpack.c.b16 %v1172, %v1168
        %v1273 = vpack.c.b16 %v1173, %v1169
        %v1274 = vpack.c.b16 %v1174, %v1170
        %v1275 = vpack.c.b16 %v1179, %v1175
        %v1276 = vpack.c.b16 %v1180, %v1176
        %v1277 = vpack.c.b16 %v1181, %v1177
        %v1278 = vpack.c.b16 %v1182, %v1178
        %v1279 = vpack.c.b16 %v1187, %v1183
        %v1280 = vpack.c.b16 %v1188, %v1184
        %v1281 = vpack.c.b16 %v1189, %v1185
        %v1282 = vpack.c.b16 %v1190, %v1186
        %v1283 = vpack.c.b16 %v1195, %v1191
        %v1284 = vpack.c.b16 %v1196, %v1192
        %v1285 = vpack.c.b16 %v1197, %v1193
        %v1286 = vpack.c.b16 %v1198, %v1194
        %v1287 = vpack.c.b16 %v1203, %v1199
        %v1288 = vpack.c.b16 %v1204, %v1200
        %v1289 = vpack.c.b16 %v1205, %v1201
        %v1290 = vpack.c.b16 %v1206, %v1202
        %v1291 = vpack.c.b16 %v1211, %v1207
        %v1292 = vpack.c.b16 %v1212, %v1208
        %v1293 = vpack.c.b16 %v1213, %v1209
        %v1294 = vpack.c.b16 %v1214, %v1210
        %v1295 = vpack.c.b16 %v1219, %v1215
        %v1296 = vpack.c.b16 %v1220, %v1216
        %v1297 = vpack.c.b16 %v1221, %v1217
        %v1298 = vpack.c.b16 %v1222, %v1218
        %v1299 = vpack.c.b16 %v1227, %v1223
        %v1300 = vpack.c.b16 %v1228, %v1224
        %v1301 = vpack.c.b16 %v1229, %v1225
        %v1302 = vpack.c.b16 %v1230, %v1226
        %v1303 = vpack.c.b16 %v1235, %v1231
        %v1304 = vpack.c.b16 %v1236, %v1232
        %v1305 = vpack.c.b16 %v1237, %v1233
        %v1306 = vpack.c.b16 %v1238, %v1234
        %v1307 = vpack.c.b16 %v1243, %v1239
        %v1308 = vpack.c.b16 %v1244, %v1240
        %v1309 = vpack.c.b16 %v1245, %v1241
        %v1310 = vpack.c.b16 %v1246, %v1242
        %1375 = vmatpush.bf16.msra.mxu0 %v1275
        %1376 = vmatpush.bf16.msra.mxu0 %v1271
        %1377 = vmatpush.bf16.msra.mxu0 %v1267
        %1378 = vmatpush.bf16.msra.mxu0 %v1263
        %1379 = vmatpush.bf16.msra.mxu0 %v1259
        %1380 = vmatpush.bf16.msra.mxu0 %v1255
        %1381 = vmatpush.bf16.msra.mxu0 %v1251
        %1382 = vmatpush.bf16.msra.mxu0 %v1247
        %1383 = vmatmul.bf16.gmra.mxu0 %v817
        %v1384 = vpop.f32.mrf.mxu0
        %v1385 = vadd.f32 %v1047, %v1384
        %v1386 = vpop.f32.mrf.mxu0
        %v1387 = vadd.f32 %v1047, %v1386
        %1388 = vmatmul.bf16.gmra.mxu0 %v819
        %v1389 = vpop.f32.mrf.mxu0
        %v1390 = vadd.f32 %v1047, %v1389
        %v1391 = vpop.f32.mrf.mxu0
        %v1392 = vadd.f32 %v1047, %v1391
        %1393 = vdwg.mxu0
        %1394 = vmatpush.bf16.msra.mxu0 %v1307
        %1395 = vmatpush.bf16.msra.mxu0 %v1303
        %1396 = vmatpush.bf16.msra.mxu0 %v1299
        %1397 = vmatpush.bf16.msra.mxu0 %v1295
        %1398 = vmatpush.bf16.msra.mxu0 %v1291
        %1399 = vmatpush.bf16.msra.mxu0 %v1287
        %1400 = vmatpush.bf16.msra.mxu0 %v1283
        %1401 = vmatpush.bf16.msra.mxu0 %v1279
        %1402 = vmatmul.bf16.gmra.mxu0 %v818
        %v1403 = vpop.f32.mrf.mxu0
        %v1404 = vadd.f32 %v1385, %v1403
        %v1405 = vpop.f32.mrf.mxu0
        %v1406 = vadd.f32 %v1387, %v1405
        %1407 = vmatmul.bf16.gmra.mxu0 %v820
        %v1408 = vpop.f32.mrf.mxu0
        %v1409 = vadd.f32 %v1390, %v1408
        %v1410 = vpop.f32.mrf.mxu0
        %v1411 = vadd.f32 %v1392, %v1410
        %1412 = vdwg.mxu0
        %1413 = vmatpush.bf16.msra.mxu0 %v1276
        %1414 = vmatpush.bf16.msra.mxu0 %v1272
        %1415 = vmatpush.bf16.msra.mxu0 %v1268
        %1416 = vmatpush.bf16.msra.mxu0 %v1264
        %1417 = vmatpush.bf16.msra.mxu0 %v1260
        %1418 = vmatpush.bf16.msra.mxu0 %v1256
        %1419 = vmatpush.bf16.msra.mxu0 %v1252
        %1420 = vmatpush.bf16.msra.mxu0 %v1248
        %1421 = vmatmul.bf16.gmra.mxu0 %v817
        %v1422 = vpop.f32.mrf.mxu0
        %v1423 = vadd.f32 %v1048, %v1422
        %v1424 = vpop.f32.mrf.mxu0
        %v1425 = vadd.f32 %v1048, %v1424
        %1426 = vmatmul.bf16.gmra.mxu0 %v819
        %v1427 = vpop.f32.mrf.mxu0
        %v1428 = vadd.f32 %v1048, %v1427
        %v1429 = vpop.f32.mrf.mxu0
        %v1430 = vadd.f32 %v1048, %v1429
        %1431 = vdwg.mxu0
        %1432 = vmatpush.bf16.msra.mxu0 %v1308
        %1433 = vmatpush.bf16.msra.mxu0 %v1304
        %1434 = vmatpush.bf16.msra.mxu0 %v1300
        %1435 = vmatpush.bf16.msra.mxu0 %v1296
        %1436 = vmatpush.bf16.msra.mxu0 %v1292
        %1437 = vmatpush.bf16.msra.mxu0 %v1288
        %1438 = vmatpush.bf16.msra.mxu0 %v1284
        %1439 = vmatpush.bf16.msra.mxu0 %v1280
        %1440 = vmatmul.bf16.gmra.mxu0 %v818
        %v1441 = vpop.f32.mrf.mxu0
        %v1442 = vadd.f32 %v1423, %v1441
        %v1443 = vpop.f32.mrf.mxu0
        %v1444 = vadd.f32 %v1425, %v1443
        %1445 = vmatmul.bf16.gmra.mxu0 %v820
        %v1446 = vpop.f32.mrf.mxu0
        %v1447 = vadd.f32 %v1428, %v1446
        %v1448 = vpop.f32.mrf.mxu0
        %v1449 = vadd.f32 %v1430, %v1448
        %1450 = vdwg.mxu0
        %1451 = vmatpush.bf16.msra.mxu0 %v1277
        %1452 = vmatpush.bf16.msra.mxu0 %v1273
        %1453 = vmatpush.bf16.msra.mxu0 %v1269
        %1454 = vmatpush.bf16.msra.mxu0 %v1265
        %1455 = vmatpush.bf16.msra.mxu0 %v1261
        %1456 = vmatpush.bf16.msra.mxu0 %v1257
        %1457 = vmatpush.bf16.msra.mxu0 %v1253
        %1458 = vmatpush.bf16.msra.mxu0 %v1249
        %1459 = vmatmul.bf16.gmra.mxu0 %v817
        %v1460 = vpop.f32.mrf.mxu0
        %v1461 = vadd.f32 %v1049, %v1460
        %v1462 = vpop.f32.mrf.mxu0
        %v1463 = vadd.f32 %v1049, %v1462
        %1464 = vmatmul.bf16.gmra.mxu0 %v819
        %v1465 = vpop.f32.mrf.mxu0
        %v1466 = vadd.f32 %v1049, %v1465
        %v1467 = vpop.f32.mrf.mxu0
        %v1468 = vadd.f32 %v1049, %v1467
        %1469 = vdwg.mxu0
        %1470 = vmatpush.bf16.msra.mxu0 %v1309
        %1471 = vmatpush.bf16.msra.mxu0 %v1305
        %1472 = vmatpush.bf16.msra.mxu0 %v1301
        %1473 = vmatpush.bf16.msra.mxu0 %v1297
        %1474 = vmatpush.bf16.msra.mxu0 %v1293
        %1475 = vmatpush.bf16.msra.mxu0 %v1289
        %1476 = vmatpush.bf16.msra.mxu0 %v1285
        %1477 = vmatpush.bf16.msra.mxu0 %v1281
        %1478 = vmatmul.bf16.gmra.mxu0 %v818
        %v1479 = vpop.f32.mrf.mxu0
        %v1480 = vadd.f32 %v1461, %v1479
        %v1481 = vpop.f32.mrf.mxu0
        %v1482 = vadd.f32 %v1463, %v1481
        %1483 = vmatmul.bf16.gmra.mxu0 %v820
        %v1484 = vpop.f32.mrf.mxu0
        %v1485 = vadd.f32 %v1466, %v1484
        %v1486 = vpop.f32.mrf.mxu0
        %v1487 = vadd.f32 %v1468, %v1486
        %1488 = vdwg.mxu0
        %1489 = vmatpush.bf16.msra.mxu0 %v1278
        %1490 = vmatpush.bf16.msra.mxu0 %v1274
        %1491 = vmatpush.bf16.msra.mxu0 %v1270
        %1492 = vmatpush.bf16.msra.mxu0 %v1266
        %1493 = vmatpush.bf16.msra.mxu0 %v1262
        %1494 = vmatpush.bf16.msra.mxu0 %v1258
        %1495 = vmatpush.bf16.msra.mxu0 %v1254
        %1496 = vmatpush.bf16.msra.mxu0 %v1250
        %1497 = vmatmul.bf16.gmra.mxu0 %v817
        %v1498 = vpop.f32.mrf.mxu0
        %v1499 = vadd.f32 %v1050, %v1498
        %v1500 = vpop.f32.mrf.mxu0
        %v1501 = vadd.f32 %v1050, %v1500
        %1502 = vmatmul.bf16.gmra.mxu0 %v819
        %v1503 = vpop.f32.mrf.mxu0
        %v1504 = vadd.f32 %v1050, %v1503
        %v1505 = vpop.f32.mrf.mxu0
        %v1506 = vadd.f32 %v1050, %v1505
        %1507 = vdwg.mxu0
        %1508 = vmatpush.bf16.msra.mxu0 %v1310
        %1509 = vmatpush.bf16.msra.mxu0 %v1306
        %1510 = vmatpush.bf16.msra.mxu0 %v1302
        %1511 = vmatpush.bf16.msra.mxu0 %v1298
        %1512 = vmatpush.bf16.msra.mxu0 %v1294
        %1513 = vmatpush.bf16.msra.mxu0 %v1290
        %1514 = vmatpush.bf16.msra.mxu0 %v1286
        %1515 = vmatpush.bf16.msra.mxu0 %v1282
        %1516 = vmatmul.bf16.gmra.mxu0 %v818
        %v1517 = vpop.f32.mrf.mxu0
        %v1518 = vadd.f32 %v1499, %v1517
        %v1519 = vpop.f32.mrf.mxu0
        %v1520 = vadd.f32 %v1501, %v1519
        %1521 = vmatmul.bf16.gmra.mxu0 %v820
        %v1522 = vpop.f32.mrf.mxu0
        %v1523 = vadd.f32 %v1504, %v1522
        %v1524 = vpop.f32.mrf.mxu0
        %v1525 = vadd.f32 %v1506, %v1524
        %1526 = vdwg.mxu0
        %v1527 = vpack.c.bf16 %v1043, %v1042
        %v1528 = vpack.c.bf16 %v1045, %v1044
        %v1529 = vpack.c.bf16 %v1442, %v1404
        %v1530 = vpack.c.bf16 %v1444, %v1406
        %v1531 = vpack.c.bf16 %v1447, %v1409
        %v1532 = vpack.c.bf16 %v1449, %v1411
        %v1533 = vpack.c.bf16 %v1518, %v1480
        %v1534 = vpack.c.bf16 %v1520, %v1482
        %v1535 = vpack.c.bf16 %v1523, %v1485
        %v1536 = vpack.c.bf16 %v1525, %v1487
        %v1539 = vunpack.c.l.b16 %v1527
        %v1540 = vunpack.c.l.b16 %v1528
        %v1541 = vpack.c.b16 %v1540, %v1539
        %v1547 = vunpack.c.l.b16 %v1529
        %v1548 = vunpack.c.l.b16 %v1530
        %v1549 = vunpack.c.l.b16 %v1531
        %v1550 = vunpack.c.l.b16 %v1532
        %v1551 = vpack.c.b16 %v1548, %v1547
        %v1552 = vpack.c.b16 %v1550, %v1549
        %1555 = vmatpush.bf16.xpose.msra.mxu0 0
        %1556 = vmatpush.bf16.xpose.msra.mxu0 0
        %1557 = vmatpush.bf16.xpose.msra.mxu0 0
        %1558 = vmatpush.bf16.xpose.msra.mxu0 0
        %1559 = vmatpush.bf16.xpose.msra.mxu0 0
        %1560 = vmatpush.bf16.xpose.msra.mxu0 0
        %1561 = vmatpush.bf16.xpose.msra.mxu0 %v1552
        %1562 = vmatpush.bf16.xpose.msra.mxu0 %v1551
        %1563 = vmatmul.bf16.gmra.mxu0 %v1541
        %v1564 = vpop.f32.mrf.mxu0
        %v1565 = vadd.f32 0.0, %v1564
        %v1566 = vpop.f32.mrf.mxu0
        %v1567 = vadd.f32 0.0, %v1566
        %1568 = vdwg.mxu0
        %vm1569 = vcmask 261120
        %v1570 = vsel %vm1569, %v1565, -inf
        %1571 = vmax.xlane.f32.xlu0 %v1570
        %v1572 = vpop.xlane.xlu0 %1571
        %v1573 = vsel %vm1569, %v1567, -inf
        %1574 = vmax.xlane.f32.xlu0 %v1573
        %v1575 = vpop.xlane.xlu0 %1574
        %v1576 = vsub.f32 %v1565, %v1572
        %v1577 = vsub.f32 %v1567, %v1575
        %v1578 = vmul.f32 %v1576, 1.442695
        %v1579 = vpow.pop %v1578
        %v1580 = vmul.f32 %v1577, 1.442695
        %v1581 = vpow.pop %v1580
        %v1582 = vsel %vm1569, %v1579, 0.0
        %1583 = vadd.xlane.f32.xlu0 %v1582
        %v1584 = vpop.xlane.xlu0 %1583
        %v1585 = vsel %vm1569, %v1581, 0.0
        %1586 = vadd.xlane.f32.xlu0 %v1585
        %v1587 = vpop.xlane.xlu0 %1586
        %v1588 = vrcp.pop %v1584
        %v1589 = vrcp.pop %v1587
        %v1590 = vmul.f32 %v1579, %v1588
        %v1591 = vmul.f32 %v1581, %v1589
        %v1592 = vpack.c.bf16 %v1591, %v1590
        %v1597 = vunpack.c.l.b16 %v1533
        %v1598 = vunpack.c.l.b16 %v1534
        %v1599 = vunpack.c.l.b16 %v1535
        %v1600 = vunpack.c.l.b16 %v1536
        %v1601 = vpack.c.b16 %v1598, %v1597
        %v1602 = vpack.c.b16 %v1600, %v1599
        %v1606 = vsel %vm1569, %v1592, 0
        %1608 = vmatpush.bf16.msra.mxu0 0
        %1609 = vmatpush.bf16.msra.mxu0 0
        %1610 = vmatpush.bf16.msra.mxu0 0
        %1611 = vmatpush.bf16.msra.mxu0 0
        %1612 = vmatpush.bf16.msra.mxu0 0
        %1613 = vmatpush.bf16.msra.mxu0 0
        %1614 = vmatpush.bf16.msra.mxu0 %v1602
        %1615 = vmatpush.bf16.msra.mxu0 %v1601
        %1616 = vmatmul.bf16.gmra.mxu0 %v1606
        %v1617 = vpop.f32.mrf.mxu0
        %v1618 = vadd.f32 0.0, %v1617
        %v1619 = vpop.f32.mrf.mxu0
        %v1620 = vadd.f32 0.0, %v1619
        %1621 = vdwg.mxu0
        %v1622 = vpack.c.bf16 %v1620, %v1618
        %v1623 = vunpack.c.h.b16 %v1527
        %v1624 = vunpack.c.h.b16 %v1528
        %v1625 = vpack.c.b16 %v1624, %v1623
        %v1627 = vunpack.c.h.b16 %v1529
        %v1628 = vunpack.c.h.b16 %v1530
        %v1629 = vunpack.c.h.b16 %v1531
        %v1630 = vunpack.c.h.b16 %v1532
        %v1631 = vpack.c.b16 %v1628, %v1627
        %v1632 = vpack.c.b16 %v1630, %v1629
        %1635 = vmatpush.bf16.xpose.msra.mxu0 0
        %1636 = vmatpush.bf16.xpose.msra.mxu0 0
        %1637 = vmatpush.bf16.xpose.msra.mxu0 0
        %1638 = vmatpush.bf16.xpose.msra.mxu0 0
        %1639 = vmatpush.bf16.xpose.msra.mxu0 0
        %1640 = vmatpush.bf16.xpose.msra.mxu0 0
        %1641 = vmatpush.bf16.xpose.msra.mxu0 %v1632
        %1642 = vmatpush.bf16.xpose.msra.mxu0 %v1631
        %1643 = vmatmul.bf16.gmra.mxu0 %v1625
        %v1644 = vpop.f32.mrf.mxu0
        %v1645 = vadd.f32 0.0, %v1644
        %v1646 = vpop.f32.mrf.mxu0
        %v1647 = vadd.f32 0.0, %v1646
        %1648 = vdwg.mxu0
        %v1649 = vsel %vm1569, %v1645, -inf
        %1650 = vmax.xlane.f32.xlu0 %v1649
        %v1651 = vpop.xlane.xlu0 %1650
        %v1652 = vsel %vm1569, %v1647, -inf
        %1653 = vmax.xlane.f32.xlu0 %v1652
        %v1654 = vpop.xlane.xlu0 %1653
        %v1655 = vsub.f32 %v1645, %v1651
        %v1656 = vsub.f32 %v1647, %v1654
        %v1657 = vmul.f32 %v1655, 1.442695
        %v1658 = vpow.pop %v1657
        %v1659 = vmul.f32 %v1656, 1.442695
        %v1660 = vpow.pop %v1659
        %v1661 = vsel %vm1569, %v1658, 0.0
        %1662 = vadd.xlane.f32.xlu0 %v1661
        %v1663 = vpop.xlane.xlu0 %1662
        %v1664 = vsel %vm1569, %v1660, 0.0
        %1665 = vadd.xlane.f32.xlu0 %v1664
        %v1666 = vpop.xlane.xlu0 %1665
        %v1667 = vrcp.pop %v1663
        %v1668 = vrcp.pop %v1666
        %v1669 = vmul.f32 %v1658, %v1667
        %v1670 = vmul.f32 %v1660, %v1668
        %v1671 = vpack.c.bf16 %v1670, %v1669
        %v1672 = vunpack.c.h.b16 %v1533
        %v1673 = vunpack.c.h.b16 %v1534
        %v1674 = vunpack.c.h.b16 %v1535
        %v1675 = vunpack.c.h.b16 %v1536
        %v1676 = vpack.c.b16 %v1673, %v1672
        %v1677 = vpack.c.b16 %v1675, %v1674
        %v1681 = vsel %vm1569, %v1671, 0
        %1683 = vmatpush.bf16.msra.mxu0 0
        %1684 = vmatpush.bf16.msra.mxu0 0
        %1685 = vmatpush.bf16.msra.mxu0 0
        %1686 = vmatpush.bf16.msra.mxu0 0
        %1687 = vmatpush.bf16.msra.mxu0 0
        %1688 = vmatpush.bf16.msra.mxu0 0
        %1689 = vmatpush.bf16.msra.mxu0 %v1677
        %1690 = vmatpush.bf16.msra.mxu0 %v1676
        %1691 = vmatmul.bf16.gmra.mxu0 %v1681
        %v1692 = vpop.f32.mrf.mxu0
        %v1693 = vadd.f32 0.0, %v1692
        %v1694 = vpop.f32.mrf.mxu0
        %v1695 = vadd.f32 0.0, %v1694
        %1696 = vdwg.mxu0
        %v1697 = vpack.c.bf16 %v1695, %v1693
        %v1714 = vunpack.c.l.b16 %v595
        %v1715 = vunpack.c.h.b16 %v595
        %v1716 = vunpack.c.l.b16 %v596
        %v1717 = vunpack.c.h.b16 %v596
        %v1718 = vunpack.c.l.b16 %v597
        %v1719 = vunpack.c.h.b16 %v597
        %v1720 = vunpack.c.l.b16 %v598
        %v1721 = vunpack.c.h.b16 %v598
        %v1722 = vunpack.c.l.b16 %v599
        %v1723 = vunpack.c.h.b16 %v599
        %v1724 = vunpack.c.l.b16 %v600
        %v1725 = vunpack.c.h.b16 %v600
        %v1726 = vunpack.c.l.b16 %v601
        %v1727 = vunpack.c.h.b16 %v601
        %v1728 = vunpack.c.l.b16 %v602
        %v1729 = vunpack.c.h.b16 %v602
        %v1730 = vunpack.c.l.b16 %v603
        %v1731 = vunpack.c.h.b16 %v603
        %v1732 = vunpack.c.l.b16 %v604
        %v1733 = vunpack.c.h.b16 %v604
        %v1734 = vunpack.c.l.b16 %v605
        %v1735 = vunpack.c.h.b16 %v605
        %v1736 = vunpack.c.l.b16 %v606
        %v1737 = vunpack.c.h.b16 %v606
        %v1738 = vunpack.c.l.b16 %v607
        %v1739 = vunpack.c.h.b16 %v607
        %v1740 = vunpack.c.l.b16 %v608
        %v1741 = vunpack.c.h.b16 %v608
        %v1742 = vunpack.c.l.b16 %v609
        %v1743 = vunpack.c.h.b16 %v609
        %v1744 = vunpack.c.l.b16 %v610
        %v1745 = vunpack.c.h.b16 %v610
        %v1746 = vpack.c.b16 %v1716, %v1714
        %v1747 = vpack.c.b16 %v1717, %v1715
        %v1748 = vpack.c.b16 %v1720, %v1718
        %v1749 = vpack.c.b16 %v1721, %v1719
        %v1750 = vpack.c.b16 %v1724, %v1722
        %v1751 = vpack.c.b16 %v1725, %v1723
        %v1752 = vpack.c.b16 %v1728, %v1726
        %v1753 = vpack.c.b16 %v1729, %v1727
        %v1754 = vpack.c.b16 %v1732, %v1730
        %v1755 = vpack.c.b16 %v1733, %v1731
        %v1756 = vpack.c.b16 %v1736, %v1734
        %v1757 = vpack.c.b16 %v1737, %v1735
        %v1758 = vpack.c.b16 %v1740, %v1738
        %v1759 = vpack.c.b16 %v1741, %v1739
        %v1760 = vpack.c.b16 %v1744, %v1742
        %v1761 = vpack.c.b16 %v1745, %v1743
        %1778 = vmatpush.bf16.msra.mxu0 %v1760
        %1779 = vmatpush.bf16.msra.mxu0 %v1758
        %1780 = vmatpush.bf16.msra.mxu0 %v1756
        %1781 = vmatpush.bf16.msra.mxu0 %v1754
        %1782 = vmatpush.bf16.msra.mxu0 %v1752
        %1783 = vmatpush.bf16.msra.mxu0 %v1750
        %1784 = vmatpush.bf16.msra.mxu0 %v1748
        %1785 = vmatpush.bf16.msra.mxu0 %v1746
        %1786 = vmatmul.bf16.gmra.mxu0 %v1697
        %v1787 = vpop.f32.mrf.mxu0
        %v1788 = vadd.f32 0.0, %v1787
        %v1789 = vpop.f32.mrf.mxu0
        %v1790 = vadd.f32 0.0, %v1789
        %1791 = vdwg.mxu0
        %1792 = vmatpush.bf16.msra.mxu0 %v1761
        %1793 = vmatpush.bf16.msra.mxu0 %v1759
        %1794 = vmatpush.bf16.msra.mxu0 %v1757
        %1795 = vmatpush.bf16.msra.mxu0 %v1755
        %1796 = vmatpush.bf16.msra.mxu0 %v1753
        %1797 = vmatpush.bf16.msra.mxu0 %v1751
        %1798 = vmatpush.bf16.msra.mxu0 %v1749
        %1799 = vmatpush.bf16.msra.mxu0 %v1747
        %1800 = vmatmul.bf16.gmra.mxu0 %v1697
        %v1801 = vpop.f32.mrf.mxu0
        %v1802 = vadd.f32 0.0, %v1801
        %v1803 = vpop.f32.mrf.mxu0
        %v1804 = vadd.f32 0.0, %v1803
        %1805 = vdwg.mxu0
        %v1822 = vunpack.c.l.b16 %v579
        %v1823 = vunpack.c.h.b16 %v579
        %v1824 = vunpack.c.l.b16 %v580
        %v1825 = vunpack.c.h.b16 %v580
        %v1826 = vunpack.c.l.b16 %v581
        %v1827 = vunpack.c.h.b16 %v581
        %v1828 = vunpack.c.l.b16 %v582
        %v1829 = vunpack.c.h.b16 %v582
        %v1830 = vunpack.c.l.b16 %v583
        %v1831 = vunpack.c.h.b16 %v583
        %v1832 = vunpack.c.l.b16 %v584
        %v1833 = vunpack.c.h.b16 %v584
        %v1834 = vunpack.c.l.b16 %v585
        %v1835 = vunpack.c.h.b16 %v585
        %v1836 = vunpack.c.l.b16 %v586
        %v1837 = vunpack.c.h.b16 %v586
        %v1838 = vunpack.c.l.b16 %v587
        %v1839 = vunpack.c.h.b16 %v587
        %v1840 = vunpack.c.l.b16 %v588
        %v1841 = vunpack.c.h.b16 %v588
        %v1842 = vunpack.c.l.b16 %v589
        %v1843 = vunpack.c.h.b16 %v589
        %v1844 = vunpack.c.l.b16 %v590
        %v1845 = vunpack.c.h.b16 %v590
        %v1846 = vunpack.c.l.b16 %v591
        %v1847 = vunpack.c.h.b16 %v591
        %v1848 = vunpack.c.l.b16 %v592
        %v1849 = vunpack.c.h.b16 %v592
        %v1850 = vunpack.c.l.b16 %v593
        %v1851 = vunpack.c.h.b16 %v593
        %v1852 = vunpack.c.l.b16 %v594
        %v1853 = vunpack.c.h.b16 %v594
        %v1854 = vpack.c.b16 %v1824, %v1822
        %v1855 = vpack.c.b16 %v1825, %v1823
        %v1856 = vpack.c.b16 %v1828, %v1826
        %v1857 = vpack.c.b16 %v1829, %v1827
        %v1858 = vpack.c.b16 %v1832, %v1830
        %v1859 = vpack.c.b16 %v1833, %v1831
        %v1860 = vpack.c.b16 %v1836, %v1834
        %v1861 = vpack.c.b16 %v1837, %v1835
        %v1862 = vpack.c.b16 %v1840, %v1838
        %v1863 = vpack.c.b16 %v1841, %v1839
        %v1864 = vpack.c.b16 %v1844, %v1842
        %v1865 = vpack.c.b16 %v1845, %v1843
        %v1866 = vpack.c.b16 %v1848, %v1846
        %v1867 = vpack.c.b16 %v1849, %v1847
        %v1868 = vpack.c.b16 %v1852, %v1850
        %v1869 = vpack.c.b16 %v1853, %v1851
        %1886 = vmatpush.bf16.msra.mxu0 %v1868
        %1887 = vmatpush.bf16.msra.mxu0 %v1866
        %1888 = vmatpush.bf16.msra.mxu0 %v1864
        %1889 = vmatpush.bf16.msra.mxu0 %v1862
        %1890 = vmatpush.bf16.msra.mxu0 %v1860
        %1891 = vmatpush.bf16.msra.mxu0 %v1858
        %1892 = vmatpush.bf16.msra.mxu0 %v1856
        %1893 = vmatpush.bf16.msra.mxu0 %v1854
        %1894 = vmatmul.bf16.gmra.mxu0 %v1622
        %v1895 = vpop.f32.mrf.mxu0
        %v1896 = vadd.f32 %v1788, %v1895
        %v1897 = vpop.f32.mrf.mxu0
        %v1898 = vadd.f32 %v1790, %v1897
        %1899 = vdwg.mxu0
        %1900 = vmatpush.bf16.msra.mxu0 %v1869
        %1901 = vmatpush.bf16.msra.mxu0 %v1867
        %1902 = vmatpush.bf16.msra.mxu0 %v1865
        %1903 = vmatpush.bf16.msra.mxu0 %v1863
        %1904 = vmatpush.bf16.msra.mxu0 %v1861
        %1905 = vmatpush.bf16.msra.mxu0 %v1859
        %1906 = vmatpush.bf16.msra.mxu0 %v1857
        %1907 = vmatpush.bf16.msra.mxu0 %v1855
        %1908 = vmatmul.bf16.gmra.mxu0 %v1622
        %v1909 = vpop.f32.mrf.mxu0
        %v1910 = vadd.f32 %v1802, %v1909
        %v1911 = vpop.f32.mrf.mxu0
        %v1912 = vadd.f32 %v1804, %v1911
        %1913 = vdwg.mxu0
        %v1914 = vadd.f32 %v612, %v1896
        %v1915 = vadd.f32 %v613, %v1910
        %v1916 = vadd.f32 %v614, %v1898
        %v1917 = vadd.f32 %v615, %v1912
        %v1919 = vperm.slane %v611, 0
        %v1920 = vperm.slane %v611, 1
        %v1923 = vadd.f32 %v1914, %v1919
        %v1924 = vadd.f32 %v1915, %v1920
        %v1925 = vadd.f32 %v1916, %v1919
        %v1926 = vadd.f32 %v1917, %v1920
        %v1927 = vadd.f32 %v1923, %v1924
        %1928 = vadd.xlane.f32.xlu0 %v1927
        %v1929 = vpop.xlane.xlu0 %1928
        %v1930 = vadd.f32 %v1925, %v1926
        %1931 = vadd.xlane.f32.xlu0 %v1930
        %v1932 = vpop.xlane.xlu0 %1931
        %v1933 = vmul.f32 %v1929, %v636
        %v1934 = vmul.f32 %v1932, %v636
        %v1935 = vsub.f32 %v1923, %v1933
        %v1936 = vsub.f32 %v1924, %v1933
        %v1937 = vsub.f32 %v1925, %v1934
        %v1938 = vsub.f32 %v1926, %v1934
        %v1939 = vmul.f32 %v1935, %v1935
        %v1940 = vmul.f32 %v1936, %v1936
        %v1941 = vmul.f32 %v1937, %v1937
        %v1942 = vmul.f32 %v1938, %v1938
        %v1943 = vadd.f32 %v1939, %v1940
        %1944 = vadd.xlane.f32.xlu0 %v1943
        %v1945 = vpop.xlane.xlu0 %1944
        %v1946 = vadd.f32 %v1941, %v1942
        %1947 = vadd.xlane.f32.xlu0 %v1946
        %v1948 = vpop.xlane.xlu0 %1947
        %v1949 = vmul.f32 %v1945, %v636
        %v1950 = vmul.f32 %v1948, %v636
        %v1951 = vadd.f32 %v1949, 1e-05
        %v1952 = vadd.f32 %v1950, 1e-05
        %v1953 = vrsqrt.pop %v1951
        %v1954 = vmul.f32 %v1953, %v1951
        %v1955 = vmul.f32 %v1954, %v1953
        %v1956 = vmul.f32 0.5, %v1955
        %v1957 = vsub.f32 1.5, %v1956
        %v1958 = vmul.f32 %v1953, %v1957
        %vm1959 = vweird.f32 %v1951
        %vm1960 = vweird.f32 %v1953
        %vm1961 = vmor %vm1959, %vm1960
        %v1962 = vsel %vm1961, %v1953, %v1958
        %v1963 = vrsqrt.pop %v1952
        %v1964 = vmul.f32 %v1963, %v1952
        %v1965 = vmul.f32 %v1964, %v1963
        %v1966 = vmul.f32 0.5, %v1965
        %v1967 = vsub.f32 1.5, %v1966
        %v1968 = vmul.f32 %v1963, %v1967
        %vm1969 = vweird.f32 %v1952
        %vm1970 = vweird.f32 %v1963
        %vm1971 = vmor %vm1969, %vm1970
        %v1972 = vsel %vm1971, %v1963, %v1968
        %v1973 = vmul.f32 %v1935, %v1962
        %v1974 = vmul.f32 %v1936, %v1962
        %v1975 = vmul.f32 %v1937, %v1972
        %v1976 = vmul.f32 %v1938, %v1972
        %v1977 = vmul.f32 %v1973, %v682
        %v1978 = vmul.f32 %v1974, %v683
        %v1979 = vmul.f32 %v1975, %v682
        %v1980 = vmul.f32 %v1976, %v683
        %v1981 = vadd.f32 %v1977, %v691
        %v1982 = vadd.f32 %v1978, %v692
        %v1983 = vadd.f32 %v1979, %v691
        %v1984 = vadd.f32 %v1980, %v692
        %v1985 = vpack.c.bf16 %v1983, %v1981
        %v1986 = vpack.c.bf16 %v1984, %v1982
        %1987 = vmatpush.bf16.msra.mxu0 %v936
        %1988 = vmatpush.bf16.msra.mxu0 %v934
        %1989 = vmatpush.bf16.msra.mxu0 %v932
        %1990 = vmatpush.bf16.msra.mxu0 %v930
        %1991 = vmatpush.bf16.msra.mxu0 %v928
        %1992 = vmatpush.bf16.msra.mxu0 %v926
        %1993 = vmatpush.bf16.msra.mxu0 %v924
        %1994 = vmatpush.bf16.msra.mxu0 %v922
        %1995 = vmatmul.bf16.gmra.mxu0 %v1985
        %v1996 = vpop.f32.mrf.mxu0
        %v1997 = vadd.f32 %v822, %v1996
        %v1998 = vpop.f32.mrf.mxu0
        %v1999 = vadd.f32 %v822, %v1998
        %2000 = vdwg.mxu0
        %2001 = vmatpush.bf16.msra.mxu0 %v952
        %2002 = vmatpush.bf16.msra.mxu0 %v950
        %2003 = vmatpush.bf16.msra.mxu0 %v948
        %2004 = vmatpush.bf16.msra.mxu0 %v946
        %2005 = vmatpush.bf16.msra.mxu0 %v944
        %2006 = vmatpush.bf16.msra.mxu0 %v942
        %2007 = vmatpush.bf16.msra.mxu0 %v940
        %2008 = vmatpush.bf16.msra.mxu0 %v938
        %2009 = vmatmul.bf16.gmra.mxu0 %v1986
        %v2010 = vpop.f32.mrf.mxu0
        %v2011 = vadd.f32 %v1997, %v2010
        %v2012 = vpop.f32.mrf.mxu0
        %v2013 = vadd.f32 %v1999, %v2012
        %2014 = vdwg.mxu0
        %2015 = vmatpush.bf16.msra.mxu0 %v937
        %2016 = vmatpush.bf16.msra.mxu0 %v935
        %2017 = vmatpush.bf16.msra.mxu0 %v933
        %2018 = vmatpush.bf16.msra.mxu0 %v931
        %2019 = vmatpush.bf16.msra.mxu0 %v929
        %2020 = vmatpush.bf16.msra.mxu0 %v927
        %2021 = vmatpush.bf16.msra.mxu0 %v925
        %2022 = vmatpush.bf16.msra.mxu0 %v923
        %2023 = vmatmul.bf16.gmra.mxu0 %v1985
        %v2024 = vpop.f32.mrf.mxu0
        %v2025 = vadd.f32 %v823, %v2024
        %v2026 = vpop.f32.mrf.mxu0
        %v2027 = vadd.f32 %v823, %v2026
        %2028 = vdwg.mxu0
        %2029 = vmatpush.bf16.msra.mxu0 %v953
        %2030 = vmatpush.bf16.msra.mxu0 %v951
        %2031 = vmatpush.bf16.msra.mxu0 %v949
        %2032 = vmatpush.bf16.msra.mxu0 %v947
        %2033 = vmatpush.bf16.msra.mxu0 %v945
        %2034 = vmatpush.bf16.msra.mxu0 %v943
        %2035 = vmatpush.bf16.msra.mxu0 %v941
        %2036 = vmatpush.bf16.msra.mxu0 %v939
        %2037 = vmatmul.bf16.gmra.mxu0 %v1986
        %v2038 = vpop.f32.mrf.mxu0
        %v2039 = vadd.f32 %v2025, %v2038
        %v2040 = vpop.f32.mrf.mxu0
        %v2041 = vadd.f32 %v2027, %v2040
        %2042 = vdwg.mxu0
        %v2043 = vmul.f32 %v2011, 0.088388346
        %v2044 = vmul.f32 %v2039, 0.088388346
        %v2045 = vmul.f32 %v2013, 0.088388346
        %v2046 = vmul.f32 %v2041, 0.088388346
        %2047 = vmatpush.bf16.msra.mxu0 %v1275
        %2048 = vmatpush.bf16.msra.mxu0 %v1271
        %2049 = vmatpush.bf16.msra.mxu0 %v1267
        %2050 = vmatpush.bf16.msra.mxu0 %v1263
        %2051 = vmatpush.bf16.msra.mxu0 %v1259
        %2052 = vmatpush.bf16.msra.mxu0 %v1255
        %2053 = vmatpush.bf16.msra.mxu0 %v1251
        %2054 = vmatpush.bf16.msra.mxu0 %v1247
        %2055 = vmatmul.bf16.gmra.mxu0 %v1985
        %v2056 = vpop.f32.mrf.mxu0
        %v2057 = vadd.f32 %v1047, %v2056
        %v2058 = vpop.f32.mrf.mxu0
        %v2059 = vadd.f32 %v1047, %v2058
        %2060 = vdwg.mxu0
        %2061 = vmatpush.bf16.msra.mxu0 %v1307
        %2062 = vmatpush.bf16.msra.mxu0 %v1303
        %2063 = vmatpush.bf16.msra.mxu0 %v1299
        %2064 = vmatpush.bf16.msra.mxu0 %v1295
        %2065 = vmatpush.bf16.msra.mxu0 %v1291
        %2066 = vmatpush.bf16.msra.mxu0 %v1287
        %2067 = vmatpush.bf16.msra.mxu0 %v1283
        %2068 = vmatpush.bf16.msra.mxu0 %v1279
        %2069 = vmatmul.bf16.gmra.mxu0 %v1986
        %v2070 = vpop.f32.mrf.mxu0
        %v2071 = vadd.f32 %v2057, %v2070
        %v2072 = vpop.f32.mrf.mxu0
        %v2073 = vadd.f32 %v2059, %v2072
        %2074 = vdwg.mxu0
        %2075 = vmatpush.bf16.msra.mxu0 %v1276
        %2076 = vmatpush.bf16.msra.mxu0 %v1272
        %2077 = vmatpush.bf16.msra.mxu0 %v1268
        %2078 = vmatpush.bf16.msra.mxu0 %v1264
        %2079 = vmatpush.bf16.msra.mxu0 %v1260
        %2080 = vmatpush.bf16.msra.mxu0 %v1256
        %2081 = vmatpush.bf16.msra.mxu0 %v1252
        %2082 = vmatpush.bf16.msra.mxu0 %v1248
        %2083 = vmatmul.bf16.gmra.mxu0 %v1985
        %v2084 = vpop.f32.mrf.mxu0
        %v2085 = vadd.f32 %v1048, %v2084
        %v2086 = vpop.f32.mrf.mxu0
        %v2087 = vadd.f32 %v1048, %v2086
        %2088 = vdwg.mxu0
        %2089 = vmatpush.bf16.msra.mxu0 %v1308
        %2090 = vmatpush.bf16.msra.mxu0 %v1304
        %2091 = vmatpush.bf16.msra.mxu0 %v1300
        %2092 = vmatpush.bf16.msra.mxu0 %v1296
        %2093 = vmatpush.bf16.msra.mxu0 %v1292
        %2094 = vmatpush.bf16.msra.mxu0 %v1288
        %2095 = vmatpush.bf16.msra.mxu0 %v1284
        %2096 = vmatpush.bf16.msra.mxu0 %v1280
        %2097 = vmatmul.bf16.gmra.mxu0 %v1986
        %v2098 = vpop.f32.mrf.mxu0
        %v2099 = vadd.f32 %v2085, %v2098
        %v2100 = vpop.f32.mrf.mxu0
        %v2101 = vadd.f32 %v2087, %v2100
        %2102 = vdwg.mxu0
        %2103 = vmatpush.bf16.msra.mxu0 %v1277
        %2104 = vmatpush.bf16.msra.mxu0 %v1273
        %2105 = vmatpush.bf16.msra.mxu0 %v1269
        %2106 = vmatpush.bf16.msra.mxu0 %v1265
        %2107 = vmatpush.bf16.msra.mxu0 %v1261
        %2108 = vmatpush.bf16.msra.mxu0 %v1257
        %2109 = vmatpush.bf16.msra.mxu0 %v1253
        %2110 = vmatpush.bf16.msra.mxu0 %v1249
        %2111 = vmatmul.bf16.gmra.mxu0 %v1985
        %v2112 = vpop.f32.mrf.mxu0
        %v2113 = vadd.f32 %v1049, %v2112
        %v2114 = vpop.f32.mrf.mxu0
        %v2115 = vadd.f32 %v1049, %v2114
        %2116 = vdwg.mxu0
        %2117 = vmatpush.bf16.msra.mxu0 %v1309
        %2118 = vmatpush.bf16.msra.mxu0 %v1305
        %2119 = vmatpush.bf16.msra.mxu0 %v1301
        %2120 = vmatpush.bf16.msra.mxu0 %v1297
        %2121 = vmatpush.bf16.msra.mxu0 %v1293
        %2122 = vmatpush.bf16.msra.mxu0 %v1289
        %2123 = vmatpush.bf16.msra.mxu0 %v1285
        %2124 = vmatpush.bf16.msra.mxu0 %v1281
        %2125 = vmatmul.bf16.gmra.mxu0 %v1986
        %v2126 = vpop.f32.mrf.mxu0
        %v2127 = vadd.f32 %v2113, %v2126
        %v2128 = vpop.f32.mrf.mxu0
        %v2129 = vadd.f32 %v2115, %v2128
        %2130 = vdwg.mxu0
        %2131 = vmatpush.bf16.msra.mxu0 %v1278
        %2132 = vmatpush.bf16.msra.mxu0 %v1274
        %2133 = vmatpush.bf16.msra.mxu0 %v1270
        %2134 = vmatpush.bf16.msra.mxu0 %v1266
        %2135 = vmatpush.bf16.msra.mxu0 %v1262
        %2136 = vmatpush.bf16.msra.mxu0 %v1258
        %2137 = vmatpush.bf16.msra.mxu0 %v1254
        %2138 = vmatpush.bf16.msra.mxu0 %v1250
        %2139 = vmatmul.bf16.gmra.mxu0 %v1985
        %v2140 = vpop.f32.mrf.mxu0
        %v2141 = vadd.f32 %v1050, %v2140
        %v2142 = vpop.f32.mrf.mxu0
        %v2143 = vadd.f32 %v1050, %v2142
        %2144 = vdwg.mxu0
        %2145 = vmatpush.bf16.msra.mxu0 %v1310
        %2146 = vmatpush.bf16.msra.mxu0 %v1306
        %2147 = vmatpush.bf16.msra.mxu0 %v1302
        %2148 = vmatpush.bf16.msra.mxu0 %v1298
        %2149 = vmatpush.bf16.msra.mxu0 %v1294
        %2150 = vmatpush.bf16.msra.mxu0 %v1290
        %2151 = vmatpush.bf16.msra.mxu0 %v1286
        %2152 = vmatpush.bf16.msra.mxu0 %v1282
        %2153 = vmatmul.bf16.gmra.mxu0 %v1986
        %v2154 = vpop.f32.mrf.mxu0
        %v2155 = vadd.f32 %v2141, %v2154
        %v2156 = vpop.f32.mrf.mxu0
        %v2157 = vadd.f32 %v2143, %v2156
        %2158 = vdwg.mxu0
        %v2159 = vpack.c.bf16 %v2044, %v2043
        %v2160 = vpack.c.bf16 %v2046, %v2045
        %v2161 = vpack.c.bf16 %v2099, %v2071
        %v2162 = vpack.c.bf16 %v2101, %v2073
        %v2163 = vpack.c.bf16 %v2155, %v2127
        %v2164 = vpack.c.bf16 %v2157, %v2129
        %v2167 = vunpack.c.l.b16 %v2159
        %v2168 = vunpack.c.l.b16 %v2160
        %v2169 = vpack.c.b16 %v2168, %v2167
        %v2173 = vunpack.c.l.b16 %v2161
        %v2174 = vunpack.c.l.b16 %v2162
        %v2175 = vpack.c.b16 %v2174, %v2173
        %2177 = vmatpush.bf16.xpose.msra.mxu0 0
        %2178 = vmatpush.bf16.xpose.msra.mxu0 0
        %2179 = vmatpush.bf16.xpose.msra.mxu0 0
        %2180 = vmatpush.bf16.xpose.msra.mxu0 0
        %2181 = vmatpush.bf16.xpose.msra.mxu0 0
        %2182 = vmatpush.bf16.xpose.msra.mxu0 0
        %2183 = vmatpush.bf16.xpose.msra.mxu0 0
        %2184 = vmatpush.bf16.xpose.msra.mxu0 %v2175
        %2185 = vmatmul.bf16.gmra.mxu0 %v2169
        %v2186 = vpop.f32.mrf.mxu0
        %v2187 = vadd.f32 0.0, %v2186
        %v2188 = vpop.f32.mrf.mxu0
        %v2189 = vadd.f32 0.0, %v2188
        %2190 = vdwg.mxu0
        %vm2191 = vcmask 130048
        %v2192 = vsel %vm2191, %v2187, -inf
        %2193 = vmax.xlane.f32.xlu0 %v2192
        %v2194 = vpop.xlane.xlu0 %2193
        %v2195 = vsel %vm2191, %v2189, -inf
        %2196 = vmax.xlane.f32.xlu0 %v2195
        %v2197 = vpop.xlane.xlu0 %2196
        %v2198 = vsub.f32 %v2187, %v2194
        %v2199 = vsub.f32 %v2189, %v2197
        %v2200 = vmul.f32 %v2198, 1.442695
        %v2201 = vpow.pop %v2200
        %v2202 = vmul.f32 %v2199, 1.442695
        %v2203 = vpow.pop %v2202
        %v2204 = vsel %vm2191, %v2201, 0.0
        %2205 = vadd.xlane.f32.xlu0 %v2204
        %v2206 = vpop.xlane.xlu0 %2205
        %v2207 = vsel %vm2191, %v2203, 0.0
        %2208 = vadd.xlane.f32.xlu0 %v2207
        %v2209 = vpop.xlane.xlu0 %2208
        %v2210 = vrcp.pop %v2206
        %v2211 = vrcp.pop %v2209
        %v2212 = vmul.f32 %v2201, %v2210
        %v2213 = vmul.f32 %v2203, %v2211
        %v2214 = vpack.c.bf16 %v2213, %v2212
        %v2217 = vunpack.c.l.b16 %v2163
        %v2218 = vunpack.c.l.b16 %v2164
        %v2219 = vpack.c.b16 %v2218, %v2217
        %v2222 = vsel %vm2191, %v2214, 0
        %2224 = vmatpush.bf16.msra.mxu0 0
        %2225 = vmatpush.bf16.msra.mxu0 0
        %2226 = vmatpush.bf16.msra.mxu0 0
        %2227 = vmatpush.bf16.msra.mxu0 0
        %2228 = vmatpush.bf16.msra.mxu0 0
        %2229 = vmatpush.bf16.msra.mxu0 0
        %2230 = vmatpush.bf16.msra.mxu0 0
        %2231 = vmatpush.bf16.msra.mxu0 %v2219
        %2232 = vmatmul.bf16.gmra.mxu0 %v2222
        %v2233 = vpop.f32.mrf.mxu0
        %v2234 = vadd.f32 0.0, %v2233
        %v2235 = vpop.f32.mrf.mxu0
        %v2236 = vadd.f32 0.0, %v2235
        %2237 = vdwg.mxu0
        %v2238 = vpack.c.bf16 %v2236, %v2234
        %v2239 = vunpack.c.h.b16 %v2159
        %v2240 = vunpack.c.h.b16 %v2160
        %v2241 = vpack.c.b16 %v2240, %v2239
        %v2243 = vunpack.c.h.b16 %v2161
        %v2244 = vunpack.c.h.b16 %v2162
        %v2245 = vpack.c.b16 %v2244, %v2243
        %2247 = vmatpush.bf16.xpose.msra.mxu0 0
        %2248 = vmatpush.bf16.xpose.msra.mxu0 0
        %2249 = vmatpush.bf16.xpose.msra.mxu0 0
        %2250 = vmatpush.bf16.xpose.msra.mxu0 0
        %2251 = vmatpush.bf16.xpose.msra.mxu0 0
        %2252 = vmatpush.bf16.xpose.msra.mxu0 0
        %2253 = vmatpush.bf16.xpose.msra.mxu0 0
        %2254 = vmatpush.bf16.xpose.msra.mxu0 %v2245
        %2255 = vmatmul.bf16.gmra.mxu0 %v2241
        %v2256 = vpop.f32.mrf.mxu0
        %v2257 = vadd.f32 0.0, %v2256
        %v2258 = vpop.f32.mrf.mxu0
        %v2259 = vadd.f32 0.0, %v2258
        %2260 = vdwg.mxu0
        %v2261 = vsel %vm2191, %v2257, -inf
        %2262 = vmax.xlane.f32.xlu0 %v2261
        %v2263 = vpop.xlane.xlu0 %2262
        %v2264 = vsel %vm2191, %v2259, -inf
        %2265 = vmax.xlane.f32.xlu0 %v2264
        %v2266 = vpop.xlane.xlu0 %2265
        %v2267 = vsub.f32 %v2257, %v2263
        %v2268 = vsub.f32 %v2259, %v2266
        %v2269 = vmul.f32 %v2267, 1.442695
        %v2270 = vpow.pop %v2269
        %v2271 = vmul.f32 %v2268, 1.442695
        %v2272 = vpow.pop %v2271
        %v2273 = vsel %vm2191, %v2270, 0.0
        %2274 = vadd.xlane.f32.xlu0 %v2273
        %v2275 = vpop.xlane.xlu0 %2274
        %v2276 = vsel %vm2191, %v2272, 0.0
        %2277 = vadd.xlane.f32.xlu0 %v2276
        %v2278 = vpop.xlane.xlu0 %2277
        %v2279 = vrcp.pop %v2275
        %v2280 = vrcp.pop %v2278
        %v2281 = vmul.f32 %v2270, %v2279
        %v2282 = vmul.f32 %v2272, %v2280
        %v2283 = vpack.c.bf16 %v2282, %v2281
        %v2284 = vunpack.c.h.b16 %v2163
        %v2285 = vunpack.c.h.b16 %v2164
        %v2286 = vpack.c.b16 %v2285, %v2284
        %v2289 = vsel %vm2191, %v2283, 0
        %2291 = vmatpush.bf16.msra.mxu0 0
        %2292 = vmatpush.bf16.msra.mxu0 0
        %2293 = vmatpush.bf16.msra.mxu0 0
        %2294 = vmatpush.bf16.msra.mxu0 0
        %2295 = vmatpush.bf16.msra.mxu0 0
        %2296 = vmatpush.bf16.msra.mxu0 0
        %2297 = vmatpush.bf16.msra.mxu0 0
        %2298 = vmatpush.bf16.msra.mxu0 %v2286
        %2299 = vmatmul.bf16.gmra.mxu0 %v2289
        %v2300 = vpop.f32.mrf.mxu0
        %v2301 = vadd.f32 0.0, %v2300
        %v2302 = vpop.f32.mrf.mxu0
        %v2303 = vadd.f32 0.0, %v2302
        %2304 = vdwg.mxu0
        %v2305 = vpack.c.bf16 %v2303, %v2301
        %2306 = vmatpush.bf16.msra.mxu0 %v1760
        %2307 = vmatpush.bf16.msra.mxu0 %v1758
        %2308 = vmatpush.bf16.msra.mxu0 %v1756
        %2309 = vmatpush.bf16.msra.mxu0 %v1754
        %2310 = vmatpush.bf16.msra.mxu0 %v1752
        %2311 = vmatpush.bf16.msra.mxu0 %v1750
        %2312 = vmatpush.bf16.msra.mxu0 %v1748
        %2313 = vmatpush.bf16.msra.mxu0 %v1746
        %2314 = vmatmul.bf16.gmra.mxu0 %v2305
        %v2315 = vpop.f32.mrf.mxu0
        %v2316 = vadd.f32 0.0, %v2315
        %v2317 = vpop.f32.mrf.mxu0
        %v2318 = vadd.f32 0.0, %v2317
        %2319 = vdwg.mxu0
        %2320 = vmatpush.bf16.msra.mxu0 %v1761
        %2321 = vmatpush.bf16.msra.mxu0 %v1759
        %2322 = vmatpush.bf16.msra.mxu0 %v1757
        %2323 = vmatpush.bf16.msra.mxu0 %v1755
        %2324 = vmatpush.bf16.msra.mxu0 %v1753
        %2325 = vmatpush.bf16.msra.mxu0 %v1751
        %2326 = vmatpush.bf16.msra.mxu0 %v1749
        %2327 = vmatpush.bf16.msra.mxu0 %v1747
        %2328 = vmatmul.bf16.gmra.mxu0 %v2305
        %v2329 = vpop.f32.mrf.mxu0
        %v2330 = vadd.f32 0.0, %v2329
        %v2331 = vpop.f32.mrf.mxu0
        %v2332 = vadd.f32 0.0, %v2331
        %2333 = vdwg.mxu0
        %2334 = vmatpush.bf16.msra.mxu0 %v1868
        %2335 = vmatpush.bf16.msra.mxu0 %v1866
        %2336 = vmatpush.bf16.msra.mxu0 %v1864
        %2337 = vmatpush.bf16.msra.mxu0 %v1862
        %2338 = vmatpush.bf16.msra.mxu0 %v1860
        %2339 = vmatpush.bf16.msra.mxu0 %v1858
        %2340 = vmatpush.bf16.msra.mxu0 %v1856
        %2341 = vmatpush.bf16.msra.mxu0 %v1854
        %2342 = vmatmul.bf16.gmra.mxu0 %v2238
        %v2343 = vpop.f32.mrf.mxu0
        %v2344 = vadd.f32 %v2316, %v2343
        %v2345 = vpop.f32.mrf.mxu0
        %v2346 = vadd.f32 %v2318, %v2345
        %2347 = vdwg.mxu0
        %2348 = vmatpush.bf16.msra.mxu0 %v1869
        %2349 = vmatpush.bf16.msra.mxu0 %v1867
        %2350 = vmatpush.bf16.msra.mxu0 %v1865
        %2351 = vmatpush.bf16.msra.mxu0 %v1863
        %2352 = vmatpush.bf16.msra.mxu0 %v1861
        %2353 = vmatpush.bf16.msra.mxu0 %v1859
        %2354 = vmatpush.bf16.msra.mxu0 %v1857
        %2355 = vmatpush.bf16.msra.mxu0 %v1855
        %2356 = vmatmul.bf16.gmra.mxu0 %v2238
        %v2357 = vpop.f32.mrf.mxu0
        %v2358 = vadd.f32 %v2330, %v2357
        %v2359 = vpop.f32.mrf.mxu0
        %v2360 = vadd.f32 %v2332, %v2359
        %2361 = vdwg.mxu0
        %v2362 = vadd.f32 %v1923, %v2344
        %v2363 = vadd.f32 %v1924, %v2358
        %v2364 = vadd.f32 %v1925, %v2346
        %v2365 = vadd.f32 %v1926, %v2360
        %v2366 = vadd.f32 %v2362, %v1919
        %v2367 = vadd.f32 %v2363, %v1920
        %v2368 = vadd.f32 %v2364, %v1919
        %v2369 = vadd.f32 %v2365, %v1920
        %2370 = vst [vmem:[%s475] sm:$0xff] %v2366
        %2371 = vst [vmem:[%s475 + $0x8] sm:$0xff] %v2367
        %2372 = vst [vmem:[%s475 + $0x10] sm:$0xff] %v2368
        %2373 = vst [vmem:[%s475 + $0x18] sm:$0xff] %v2369
        %s2374 = sand.u32 %s253, 1
        %s2375 = scalar_lea.sflag [#allocation4], %s2374
        %s2376 = sand.u32 %s253, 1
        %s2377 = smul.addr %s2376, 32
        %s2378 = scalar_lea.vmem [#allocation14], %s2377
        // Predicated region
        $region89: #{tpu_custom_call.1} parent=59 // pred_check
          %p2379 = pneg %p263
        $region90: #{tpu_custom_call.1} parent=59 // pred_check_branch
          %2381 = sbr.rel (%p2379) target = $region92
        $region91: #{tpu_custom_call.1} parent=59 // pred_region
          %s2382 = smul.u32 2, %s30
          %2384 = vsyncadd %s2375, 0
          %s2385 = smul.addr %s2382, 2
          %s2386 = smul.addr %s2385, 8
          %s2387 = scalar_lea.hbm %s10, %s2386
          %s2388 = sshll.u32 %s2378, 4
          %s2389 = int_to_ptr.vmem [resolvable:$true] %s2388
          %s2390 = sshll.u32 %s2387, 4
          %s2391 = int_to_ptr.hbm [resolvable:$true] %s2390
          %2396 = dma.vmem_to_hbm [thread:$0]  %s2389, 512, %s2391, %s2375, 256, 256, 16
        $region92: #{tpu_custom_call.1} parent=59 // pred_fallthru
          _
      $region60: #{tpu_custom_call.1} parent=5 // pred_fallthru
        _
      %p2397 = scmp.le.s32.totalorder 2, %s25
      // Predicated region
      $region93: #{tpu_custom_call.1} parent=5 // pred_check
        %p2398 = pneg %p2397
      $region94: #{tpu_custom_call.1} parent=5 // pred_check_branch
        %2400 = sbr.rel (%p2398) target = $region96
      $region95: #{tpu_custom_call.1} parent=5 // pred_region
        %s2401 = ssub.s32 %s25, 2
        // Predicated region
        $region97: #{tpu_custom_call.1} parent=95 // pred_check
          %p2402 = pneg %p269
        $region98: #{tpu_custom_call.1} parent=95 // pred_check_branch
          %2404 = sbr.rel (%p2402) target = $region100
        $region99: #{tpu_custom_call.1} parent=95 // pred_region
          %s2405 = sand.u32 %s254, 1
          %s2406 = scalar_lea.sflag [#allocation4], %s2405
          %s2407 = sand.u32 %s254, 1
          %s2408 = smul.addr %s2407, 32
          %s2409 = scalar_lea.vmem [#allocation14], %s2408
          %2411 = dma.done %s2406, 512
        $region100: #{tpu_custom_call.1} parent=95 // pred_fallthru
          _
      $region96: #{tpu_custom_call.1} parent=5 // pred_fallthru
        _
    $region6: #{tpu_custom_call.1} parent=1 // loop_footer
      %s29 = sadd.s32 1, %s25
    $region7: #{tpu_custom_call.1} parent=1 // loop_footer_branch
      %24 = sbr.rel target = $region3
    $region8: #{tpu_custom_call.1} parent=1 // loop_exit
      _
    %2412 = vsyncpa [#allocation3], 1
    %s2413 = scalar_lea.sflag [#allocation3], 1
    %2414 = vsyncpa %s2413, 1
    %2415 = vsyncpa [#allocation6], 1
    %2416 = vsyncpa [#allocation9], 1
    %2417 = vsyncpa [#allocation12], 1
    %2418 = vsyncpa [#allocation4], 1
    %s2419 = scalar_lea.sflag [#allocation4], 1
    %2420 = vsyncpa %s2419, 1

</llo_original>
